<compile_context>
chip_gen: v5e
topology: v5e:2x2
jax: 0.10.0
libtpu: 0.0.40
codegen_flags: <defaults>
</compile_context>

<pallas_src>
import jax
import jax.numpy as jnp
from jax.experimental import pallas as pl
from jax.experimental.pallas import tpu as pltpu

K = 5            # conv kernel size
PAD = 2          # "same" padding for 5x5
CIN = 10         # conv input channels (fixed by Conv2d(10, 10, 5))
COUT = 10        # conv output channels
CP = 16          # input channels padded to 2 full sublane tiles
COUT_P = 16      # output channels padded to 2 full sublane tiles
KDEPTH = K * K * CIN          # real contraction depth (250)
KROWS = 256                   # contraction depth padded to one MXU K tile
# Tap groups for the chunked accumulating matmuls; row starts 0/80/160 are
# multiples of 8 (sublane aligned), last chunk covers the 6 zero pad rows.
TAP_CHUNKS = ((0, 8), (8, 16), (16, 25))


def _round_up(n, m):
    return ((n + m - 1) // m) * m


def model2_forward(x_nchw, w_oihw, bias):
    """x_nchw: (N, CIN, H, W) f32; w_oihw: (COUT, CIN, K, K); bias: (COUT,)."""
    N, Cin, H, W = x_nchw.shape
    Cout = w_oihw.shape[0]
    assert w_oihw.shape == (COUT, CIN, K, K) and (Cin, Cout) == (CIN, COUT)
    # The residual (op1) reads the input channels straight out of flat_v, so
    # this kernel requires Cout == Cin (true for Model2's Conv2d(10, 10, 5)).
    assert Cout == Cin, "residual add requires Cout == Cin"

    Hp, Wp = H + 2 * PAD, W + 2 * PAD
    L = Hp * Wp                       # flattened padded spatial size (400)
    LPAD = _round_up(L, 128)          # lane-padded (512) -> full lane tiles

    # Roll-based im2col never wraps for kept output positions:
    #   kept p = (h+PAD)*Wp + (w+PAD); tap offset delta = (kh-PAD)*Wp + (kw-PAD)
    #   -> p + delta = (h+kh)*Wp + (w+kw) in [0, Hp*Wp) = [0, L) subset [0, LPAD)
    max_delta = PAD * Wp + PAD
    assert (PAD * Wp + PAD) - max_delta >= 0            # min kept index stays >= 0
    assert (H - 1 + PAD) * Wp + (W - 1 + PAD) + max_delta < LPAD

    # VMEM guard: the im2col scratch scales with Hp*Wp; add a lane-tiled
    # spatial grid axis before reusing this at large H, W (esp. v7x: 64 MiB).
    assert KROWS * LPAD * 4 <= 8 * 1024 * 1024, "spatial tiling needed"

    # --- wrapper-side layout prep (pad / reshape only, no big relayouts) ----
    xpad = jnp.pad(x_nchw, ((0, 0), (0, 0), (PAD, PAD), (PAD, PAD)))
    flat = xpad.reshape(N, Cin, L)
    flat = jnp.pad(flat, ((0, 0), (0, CP - Cin), (0, LPAD - L)))   # (N, CP, LPAD)

    # weight matrix: wmat[co, t*CIN + ci] = w[co, ci, kh, kw], t = kh*K + kw
    w_k = jnp.transpose(w_oihw, (2, 3, 1, 0))            # (K, K, CIN, COUT)
    wmat = w_k.reshape(K * K * CIN, COUT).T               # (COUT, 250)
    wmat = jnp.pad(wmat, ((0, COUT_P - Cout), (0, KROWS - KDEPTH)))  # (16, 256)
    b2d = jnp.pad(bias, (0, COUT_P - Cout)).reshape(COUT_P, 1)        # (16, 1)

    def kernel(flat_ref, w_ref, b_ref, out_ref, stack_ref):
        # flat_ref : (1, CP, LPAD)      padded image, channels-major, flattened
        # w_ref    : (COUT_P, KROWS)    conv weights on the contraction dim
        # b_ref    : (COUT_P, 1)        bias (zero rows for padded channels)
        # out_ref  : (1, COUT_P, LPAD)  conv + bias + residual (padded coords)
        # stack_ref: (KROWS, LPAD)      VMEM scratch: in-kernel im2col
        flat_v = flat_ref[0]                              # (CP, LPAD)

        # Zero the 6 padded contraction rows (never written by the tap loop)
        # so uninitialized-VMEM garbage can't leak NaNs into the matmul.
        stack_ref[pl.ds(KDEPTH, KROWS - KDEPTH), :] = jnp.zeros(
            (KROWS - KDEPTH, LPAD), jnp.float32)

        # bias + op1 residual (padded channels of flat_v are zero, so padded
        # output rows stay zero and are sliced off in the wrapper).
        acc = b_ref[...] + flat_v                         # (16, LPAD) f32

        for t0, t1 in TAP_CHUNKS:
            # im2col for this group of taps: one XLU lane rotation per tap,
            # 10 real channels written at sublane offset t*CIN.
            for t in range(t0, t1):
                kh, kw = divmod(t, K)
                delta = (kh - PAD) * Wp + (kw - PAD)
                sh = (-delta) % LPAD
                shifted = flat_v if sh == 0 else pltpu.roll(flat_v, sh, axis=1)
                stack_ref[pl.ds(t * CIN, CIN), :] = shifted[:CIN, :]
            # Accumulating chunk matmul: depends only on this chunk's rows, so
            # the MXU starts while later taps are still being rolled/stored.
            r0 = t0 * CIN
            r1 = KROWS if t1 == K * K else t1 * CIN
            acc = acc + jnp.dot(
                w_ref[:, pl.ds(r0, r1 - r0)],
                stack_ref[pl.ds(r0, r1 - r0), :],
                preferred_element_type=jnp.float32)

        out_ref[0] = acc.astype(out_ref.dtype)

    out_full = pl.pallas_call(
        kernel,
        out_shape=jax.ShapeDtypeStruct((N, COUT_P, LPAD), x_nchw.dtype),
        grid_spec=pltpu.PrefetchScalarGridSpec(
            num_scalar_prefetch=0,
            grid=(N,),
            in_specs=[
                pl.BlockSpec((1, CP, LPAD), lambda n: (n, 0, 0)),
                pl.BlockSpec((COUT_P, KROWS), lambda n: (0, 0)),
                pl.BlockSpec((COUT_P, 1), lambda n: (0, 0)),
            ],
            out_specs=pl.BlockSpec((1, COUT_P, LPAD), lambda n: (n, 0, 0)),
            scratch_shapes=[pltpu.VMEM((KROWS, LPAD), jnp.float32)],
        ),
        compiler_params=pltpu.CompilerParams(
            dimension_semantics=(pltpu.PARALLEL,),
            vmem_limit_bytes=32 * 1024 * 1024,
        ),
    )(flat, wmat, b2d)

    # drop padded channels, lane padding and the conv halo (slice/reshape only)
    out = out_full[:, :Cout, :L].reshape(N, Cout, Hp, Wp)[:, :, PAD:PAD + H,
                                                          PAD:PAD + W]
    return out


def _reference(x_nchw, w_oihw, bias):
    """Pure-JAX reference: conv2d (stride 1, pad 2) + bias + input."""
    conv = jax.lax.conv_general_dilated(
        x_nchw, w_oihw, window_strides=(1, 1),
        padding=((PAD, PAD), (PAD, PAD)),
        dimension_numbers=("NCHW", "OIHW", "NCHW"))
    return conv + bias.reshape(1, -1, 1, 1) + x_nchw


if __name__ == "__main__":
    key = jax.random.PRNGKey(0)
    k_x, k_w, k_b = jax.random.split(key, 3)

    N, C, H, W = 2, 10, 16, 16          # Conv2d(10, 10, 5, padding=2)
    x = jax.random.normal(k_x, (N, C, H, W), dtype=jnp.float32)
    weight = 0.05 * jax.random.normal(k_w, (C, C, K, K), dtype=jnp.float32)
    bias = 0.1 * jax.random.normal(k_b, (C,), dtype=jnp.float32)

    out = model2_forward(x, weight, bias)
    out = jax.block_until_ready(out)

    ref = _reference(x, weight, bias)
    assert out.shape == (N, C, H, W)
    assert jnp.allclose(out, ref, rtol=1e-4, atol=1e-4), "mismatch vs reference"

    print("KERNEL_OK")
</pallas_src>

<mosaic_0001>
module attributes {stable_mosaic.version = 11 : i64} {
  func.func @kernel(%arg0: i32, %arg1: memref<1x16x512xf32, #tpu.memory_space<vmem>>, %arg2: memref<16x256xf32, #tpu.memory_space<vmem>>, %arg3: memref<16x1xf32, #tpu.memory_space<vmem>>, %arg4: memref<1x16x512xf32, #tpu.memory_space<vmem>>, %arg5: memref<256x512xf32, #tpu.memory_space<vmem>>) attributes {dimension_semantics = [#tpu.dimension_semantics<parallel>], iteration_bounds = array<i64: 2>, scalar_prefetch = 0 : i64, scratch_operands = 1 : i64, tpu.core_type = #tpu.core_type<tc>, window_params = [{transform_indices = @transform_0, window_bounds = array<i64: 1, 16, 512>}, {pipeline_mode = #tpu.pipeline_mode<synchronous>, transform_indices = @transform_1, window_bounds = array<i64: 16, 256>}, {pipeline_mode = #tpu.pipeline_mode<synchronous>, transform_indices = @transform_2, window_bounds = array<i64: 16, 1>}, {transform_indices = @transform_3, window_bounds = array<i64: 1, 16, 512>}]} {
    %c0 = arith.constant 0 : index
    %c0_0 = arith.constant 0 : index
    %c0_1 = arith.constant 0 : index
    %0 = vector.load %arg1[%c0, %c0_0, %c0_1] : memref<1x16x512xf32, #tpu.memory_space<vmem>>, vector<1x16x512xf32>
    %1 = vector.shape_cast %0 : vector<1x16x512xf32> to vector<16x512xf32>
    %cst = arith.constant 0.000000e+00 : f32
    %2 = vector.broadcast %cst : f32 to vector<6x512xf32>
    %c250 = arith.constant 250 : index
    %c0_2 = arith.constant 0 : index
    %3 = vector.load %arg5[%c250, %c0_2] : memref<256x512xf32, #tpu.memory_space<vmem>>, vector<6x512xf32>
    tpu.vector_store %arg5[%c250, %c0_2], %2 {strides = array<i32>} : memref<256x512xf32, #tpu.memory_space<vmem>>, vector<6x512xf32>,
    %c0_3 = arith.constant 0 : index
    %c0_4 = arith.constant 0 : index
    %4 = vector.load %arg3[%c0_3, %c0_4] : memref<16x1xf32, #tpu.memory_space<vmem>>, vector<16x1xf32>
    %5 = vector.broadcast %4 : vector<16x1xf32> to vector<16x512xf32>
    %6 = arith.addf %5, %1 : vector<16x512xf32>
    %c42_i32 = arith.constant 42 : i32
    %7 = tpu.dynamic_rotate %1 by %c42_i32 dim 1 : vector<16x512xf32>, i32 -> vector<16x512xf32>
    %8 = vector.extract_strided_slice %7 {offsets = [0, 0], sizes = [10, 512], strides = [1, 1]} : vector<16x512xf32> to vector<10x512xf32>
    %c0_5 = arith.constant 0 : index
    %c0_6 = arith.constant 0 : index
    %9 = vector.load %arg5[%c0_5, %c0_6] : memref<256x512xf32, #tpu.memory_space<vmem>>, vector<10x512xf32>
    tpu.vector_store %arg5[%c0_5, %c0_6], %8 {strides = array<i32>} : memref<256x512xf32, #tpu.memory_space<vmem>>, vector<10x512xf32>,
    %c41_i32 = arith.constant 41 : i32
    %10 = tpu.dynamic_rotate %1 by %c41_i32 dim 1 : vector<16x512xf32>, i32 -> vector<16x512xf32>
    %11 = vector.extract_strided_slice %10 {offsets = [0, 0], sizes = [10, 512], strides = [1, 1]} : vector<16x512xf32> to vector<10x512xf32>
    %c10 = arith.constant 10 : index
    %c0_7 = arith.constant 0 : index
    %12 = vector.load %arg5[%c10, %c0_7] : memref<256x512xf32, #tpu.memory_space<vmem>>, vector<10x512xf32>
    tpu.vector_store %arg5[%c10, %c0_7], %11 {strides = array<i32>} : memref<256x512xf32, #tpu.memory_space<vmem>>, vector<10x512xf32>,
    %c40_i32 = arith.constant 40 : i32
    %13 = tpu.dynamic_rotate %1 by %c40_i32 dim 1 : vector<16x512xf32>, i32 -> vector<16x512xf32>
    %14 = vector.extract_strided_slice %13 {offsets = [0, 0], sizes = [10, 512], strides = [1, 1]} : vector<16x512xf32> to vector<10x512xf32>
    %c20 = arith.constant 20 : index
    %c0_8 = arith.constant 0 : index
    %15 = vector.load %arg5[%c20, %c0_8] : memref<256x512xf32, #tpu.memory_space<vmem>>, vector<10x512xf32>
    tpu.vector_store %arg5[%c20, %c0_8], %14 {strides = array<i32>} : memref<256x512xf32, #tpu.memory_space<vmem>>, vector<10x512xf32>,
    %c39_i32 = arith.constant 39 : i32
    %16 = tpu.dynamic_rotate %1 by %c39_i32 dim 1 : vector<16x512xf32>, i32 -> vector<16x512xf32>
    %17 = vector.extract_strided_slice %16 {offsets = [0, 0], sizes = [10, 512], strides = [1, 1]} : vector<16x512xf32> to vector<10x512xf32>
    %c30 = arith.constant 30 : index
    %c0_9 = arith.constant 0 : index
    %18 = vector.load %arg5[%c30, %c0_9] : memref<256x512xf32, #tpu.memory_space<vmem>>, vector<10x512xf32>
    tpu.vector_store %arg5[%c30, %c0_9], %17 {strides = array<i32>} : memref<256x512xf32, #tpu.memory_space<vmem>>, vector<10x512xf32>,
    %c38_i32 = arith.constant 38 : i32
    %19 = tpu.dynamic_rotate %1 by %c38_i32 dim 1 : vector<16x512xf32>, i32 -> vector<16x512xf32>
    %20 = vector.extract_strided_slice %19 {offsets = [0, 0], sizes = [10, 512], strides = [1, 1]} : vector<16x512xf32> to vector<10x512xf32>
    %c40 = arith.constant 40 : index
    %c0_10 = arith.constant 0 : index
    %21 = vector.load %arg5[%c40, %c0_10] : memref<256x512xf32, #tpu.memory_space<vmem>>, vector<10x512xf32>
    tpu.vector_store %arg5[%c40, %c0_10], %20 {strides = array<i32>} : memref<256x512xf32, #tpu.memory_space<vmem>>, vector<10x512xf32>,
    %c22_i32 = arith.constant 22 : i32
    %22 = tpu.dynamic_rotate %1 by %c22_i32 dim 1 : vector<16x512xf32>, i32 -> vector<16x512xf32>
    %23 = vector.extract_strided_slice %22 {offsets = [0, 0], sizes = [10, 512], strides = [1, 1]} : vector<16x512xf32> to vector<10x512xf32>
    %c50 = arith.constant 50 : index
    %c0_11 = arith.constant 0 : index
    %24 = vector.load %arg5[%c50, %c0_11] : memref<256x512xf32, #tpu.memory_space<vmem>>, vector<10x512xf32>
    tpu.vector_store %arg5[%c50, %c0_11], %23 {strides = array<i32>} : memref<256x512xf32, #tpu.memory_space<vmem>>, vector<10x512xf32>,
    %c21_i32 = arith.constant 21 : i32
    %25 = tpu.dynamic_rotate %1 by %c21_i32 dim 1 : vector<16x512xf32>, i32 -> vector<16x512xf32>
    %26 = vector.extract_strided_slice %25 {offsets = [0, 0], sizes = [10, 512], strides = [1, 1]} : vector<16x512xf32> to vector<10x512xf32>
    %c60 = arith.constant 60 : index
    %c0_12 = arith.constant 0 : index
    %27 = vector.load %arg5[%c60, %c0_12] : memref<256x512xf32, #tpu.memory_space<vmem>>, vector<10x512xf32>
    tpu.vector_store %arg5[%c60, %c0_12], %26 {strides = array<i32>} : memref<256x512xf32, #tpu.memory_space<vmem>>, vector<10x512xf32>,
    %c20_i32 = arith.constant 20 : i32
    %28 = tpu.dynamic_rotate %1 by %c20_i32 dim 1 : vector<16x512xf32>, i32 -> vector<16x512xf32>
    %29 = vector.extract_strided_slice %28 {offsets = [0, 0], sizes = [10, 512], strides = [1, 1]} : vector<16x512xf32> to vector<10x512xf32>
    %c70 = arith.constant 70 : index
    %c0_13 = arith.constant 0 : index
    %30 = vector.load %arg5[%c70, %c0_13] : memref<256x512xf32, #tpu.memory_space<vmem>>, vector<10x512xf32>
    tpu.vector_store %arg5[%c70, %c0_13], %29 {strides = array<i32>} : memref<256x512xf32, #tpu.memory_space<vmem>>, vector<10x512xf32>,
    %c0_14 = arith.constant 0 : index
    %c0_15 = arith.constant 0 : index
    %31 = vector.load %arg2[%c0_14, %c0_15] : memref<16x256xf32, #tpu.memory_space<vmem>>, vector<16x80xf32>
    %c0_16 = arith.constant 0 : index
    %c0_17 = arith.constant 0 : index
    %32 = vector.load %arg5[%c0_16, %c0_17] : memref<256x512xf32, #tpu.memory_space<vmem>>, vector<80x512xf32>
    %cst_18 = arith.constant dense<0.000000e+00> : vector<16x512xf32>
    %33 = tpu.matmul %31, %32, %cst_18 {dimension_numbers = #tpu.dot_dimension_numbers<[1], [0], [0], [1], [0, 0, 1, 1], [], []>} : vector<16x80xf32>, vector<80x512xf32>, vector<16x512xf32> -> vector<16x512xf32>
    %34 = arith.addf %6, %33 : vector<16x512xf32>
    %c19_i32 = arith.constant 19 : i32
    %35 = tpu.dynamic_rotate %1 by %c19_i32 dim 1 : vector<16x512xf32>, i32 -> vector<16x512xf32>
    %36 = vector.extract_strided_slice %35 {offsets = [0, 0], sizes = [10, 512], strides = [1, 1]} : vector<16x512xf32> to vector<10x512xf32>
    %c80 = arith.constant 80 : index
    %c0_19 = arith.constant 0 : index
    %37 = vector.load %arg5[%c80, %c0_19] : memref<256x512xf32, #tpu.memory_space<vmem>>, vector<10x512xf32>
    tpu.vector_store %arg5[%c80, %c0_19], %36 {strides = array<i32>} : memref<256x512xf32, #tpu.memory_space<vmem>>, vector<10x512xf32>,
    %c18_i32 = arith.constant 18 : i32
    %38 = tpu.dynamic_rotate %1 by %c18_i32 dim 1 : vector<16x512xf32>, i32 -> vector<16x512xf32>
    %39 = vector.extract_strided_slice %38 {offsets = [0, 0], sizes = [10, 512], strides = [1, 1]} : vector<16x512xf32> to vector<10x512xf32>
    %c90 = arith.constant 90 : index
    %c0_20 = arith.constant 0 : index
    %40 = vector.load %arg5[%c90, %c0_20] : memref<256x512xf32, #tpu.memory_space<vmem>>, vector<10x512xf32>
    tpu.vector_store %arg5[%c90, %c0_20], %39 {strides = array<i32>} : memref<256x512xf32, #tpu.memory_space<vmem>>, vector<10x512xf32>,
    %c2_i32 = arith.constant 2 : i32
    %41 = tpu.dynamic_rotate %1 by %c2_i32 dim 1 : vector<16x512xf32>, i32 -> vector<16x512xf32>
    %42 = vector.extract_strided_slice %41 {offsets = [0, 0], sizes = [10, 512], strides = [1, 1]} : vector<16x512xf32> to vector<10x512xf32>
    %c100 = arith.constant 100 : index
    %c0_21 = arith.constant 0 : index
    %43 = vector.load %arg5[%c100, %c0_21] : memref<256x512xf32, #tpu.memory_space<vmem>>, vector<10x512xf32>
    tpu.vector_store %arg5[%c100, %c0_21], %42 {strides = array<i32>} : memref<256x512xf32, #tpu.memory_space<vmem>>, vector<10x512xf32>,
    %c1_i32 = arith.constant 1 : i32
    %44 = tpu.dynamic_rotate %1 by %c1_i32 dim 1 : vector<16x512xf32>, i32 -> vector<16x512xf32>
    %45 = vector.extract_strided_slice %44 {offsets = [0, 0], sizes = [10, 512], strides = [1, 1]} : vector<16x512xf32> to vector<10x512xf32>
    %c110 = arith.constant 110 : index
    %c0_22 = arith.constant 0 : index
    %46 = vector.load %arg5[%c110, %c0_22] : memref<256x512xf32, #tpu.memory_space<vmem>>, vector<10x512xf32>
    tpu.vector_store %arg5[%c110, %c0_22], %45 {strides = array<i32>} : memref<256x512xf32, #tpu.memory_space<vmem>>, vector<10x512xf32>,
    %47 = vector.extract_strided_slice %1 {offsets = [0, 0], sizes = [10, 512], strides = [1, 1]} : vector<16x512xf32> to vector<10x512xf32>
    %c120 = arith.constant 120 : index
    %c0_23 = arith.constant 0 : index
    %48 = vector.load %arg5[%c120, %c0_23] : memref<256x512xf32, #tpu.memory_space<vmem>>, vector<10x512xf32>
    tpu.vector_store %arg5[%c120, %c0_23], %47 {strides = array<i32>} : memref<256x512xf32, #tpu.memory_space<vmem>>, vector<10x512xf32>,
    %c511_i32 = arith.constant 511 : i32
    %49 = tpu.dynamic_rotate %1 by %c511_i32 dim 1 : vector<16x512xf32>, i32 -> vector<16x512xf32>
    %50 = vector.extract_strided_slice %49 {offsets = [0, 0], sizes = [10, 512], strides = [1, 1]} : vector<16x512xf32> to vector<10x512xf32>
    %c130 = arith.constant 130 : index
    %c0_24 = arith.constant 0 : index
    %51 = vector.load %arg5[%c130, %c0_24] : memref<256x512xf32, #tpu.memory_space<vmem>>, vector<10x512xf32>
    tpu.vector_store %arg5[%c130, %c0_24], %50 {strides = array<i32>} : memref<256x512xf32, #tpu.memory_space<vmem>>, vector<10x512xf32>,
    %c510_i32 = arith.constant 510 : i32
    %52 = tpu.dynamic_rotate %1 by %c510_i32 dim 1 : vector<16x512xf32>, i32 -> vector<16x512xf32>
    %53 = vector.extract_strided_slice %52 {offsets = [0, 0], sizes = [10, 512], strides = [1, 1]} : vector<16x512xf32> to vector<10x512xf32>
    %c140 = arith.constant 140 : index
    %c0_25 = arith.constant 0 : index
    %54 = vector.load %arg5[%c140, %c0_25] : memref<256x512xf32, #tpu.memory_space<vmem>>, vector<10x512xf32>
    tpu.vector_store %arg5[%c140, %c0_25], %53 {strides = array<i32>} : memref<256x512xf32, #tpu.memory_space<vmem>>, vector<10x512xf32>,
    %c494_i32 = arith.constant 494 : i32
    %55 = tpu.dynamic_rotate %1 by %c494_i32 dim 1 : vector<16x512xf32>, i32 -> vector<16x512xf32>
    %56 = vector.extract_strided_slice %55 {offsets = [0, 0], sizes = [10, 512], strides = [1, 1]} : vector<16x512xf32> to vector<10x512xf32>
    %c150 = arith.constant 150 : index
    %c0_26 = arith.constant 0 : index
    %57 = vector.load %arg5[%c150, %c0_26] : memref<256x512xf32, #tpu.memory_space<vmem>>, vector<10x512xf32>
    tpu.vector_store %arg5[%c150, %c0_26], %56 {strides = array<i32>} : memref<256x512xf32, #tpu.memory_space<vmem>>, vector<10x512xf32>,
    %c0_27 = arith.constant 0 : index
    %c80_28 = arith.constant 80 : index
    %58 = vector.load %arg2[%c0_27, %c80_28] : memref<16x256xf32, #tpu.memory_space<vmem>>, vector<16x80xf32>
    %c80_29 = arith.constant 80 : index
    %c0_30 = arith.constant 0 : index
    %59 = vector.load %arg5[%c80_29, %c0_30] : memref<256x512xf32, #tpu.memory_space<vmem>>, vector<80x512xf32>
    %cst_31 = arith.constant dense<0.000000e+00> : vector<16x512xf32>
    %60 = tpu.matmul %58, %59, %cst_31 {dimension_numbers = #tpu.dot_dimension_numbers<[1], [0], [0], [1], [0, 0, 1, 1], [], []>} : vector<16x80xf32>, vector<80x512xf32>, vector<16x512xf32> -> vector<16x512xf32>
    %61 = arith.addf %34, %60 : vector<16x512xf32>
    %c493_i32 = arith.constant 493 : i32
    %62 = tpu.dynamic_rotate %1 by %c493_i32 dim 1 : vector<16x512xf32>, i32 -> vector<16x512xf32>
    %63 = vector.extract_strided_slice %62 {offsets = [0, 0], sizes = [10, 512], strides = [1, 1]} : vector<16x512xf32> to vector<10x512xf32>
    %c160 = arith.constant 160 : index
    %c0_32 = arith.constant 0 : index
    %64 = vector.load %arg5[%c160, %c0_32] : memref<256x512xf32, #tpu.memory_space<vmem>>, vector<10x512xf32>
    tpu.vector_store %arg5[%c160, %c0_32], %63 {strides = array<i32>} : memref<256x512xf32, #tpu.memory_space<vmem>>, vector<10x512xf32>,
    %c492_i32 = arith.constant 492 : i32
    %65 = tpu.dynamic_rotate %1 by %c492_i32 dim 1 : vector<16x512xf32>, i32 -> vector<16x512xf32>
    %66 = vector.extract_strided_slice %65 {offsets = [0, 0], sizes = [10, 512], strides = [1, 1]} : vector<16x512xf32> to vector<10x512xf32>
    %c170 = arith.constant 170 : index
    %c0_33 = arith.constant 0 : index
    %67 = vector.load %arg5[%c170, %c0_33] : memref<256x512xf32, #tpu.memory_space<vmem>>, vector<10x512xf32>
    tpu.vector_store %arg5[%c170, %c0_33], %66 {strides = array<i32>} : memref<256x512xf32, #tpu.memory_space<vmem>>, vector<10x512xf32>,
    %c491_i32 = arith.constant 491 : i32
    %68 = tpu.dynamic_rotate %1 by %c491_i32 dim 1 : vector<16x512xf32>, i32 -> vector<16x512xf32>
    %69 = vector.extract_strided_slice %68 {offsets = [0, 0], sizes = [10, 512], strides = [1, 1]} : vector<16x512xf32> to vector<10x512xf32>
    %c180 = arith.constant 180 : index
    %c0_34 = arith.constant 0 : index
    %70 = vector.load %arg5[%c180, %c0_34] : memref<256x512xf32, #tpu.memory_space<vmem>>, vector<10x512xf32>
    tpu.vector_store %arg5[%c180, %c0_34], %69 {strides = array<i32>} : memref<256x512xf32, #tpu.memory_space<vmem>>, vector<10x512xf32>,
    %c490_i32 = arith.constant 490 : i32
    %71 = tpu.dynamic_rotate %1 by %c490_i32 dim 1 : vector<16x512xf32>, i32 -> vector<16x512xf32>
    %72 = vector.extract_strided_slice %71 {offsets = [0, 0], sizes = [10, 512], strides = [1, 1]} : vector<16x512xf32> to vector<10x512xf32>
    %c190 = arith.constant 190 : index
    %c0_35 = arith.constant 0 : index
    %73 = vector.load %arg5[%c190, %c0_35] : memref<256x512xf32, #tpu.memory_space<vmem>>, vector<10x512xf32>
    tpu.vector_store %arg5[%c190, %c0_35], %72 {strides = array<i32>} : memref<256x512xf32, #tpu.memory_space<vmem>>, vector<10x512xf32>,
    %c474_i32 = arith.constant 474 : i32
    %74 = tpu.dynamic_rotate %1 by %c474_i32 dim 1 : vector<16x512xf32>, i32 -> vector<16x512xf32>
    %75 = vector.extract_strided_slice %74 {offsets = [0, 0], sizes = [10, 512], strides = [1, 1]} : vector<16x512xf32> to vector<10x512xf32>
    %c200 = arith.constant 200 : index
    %c0_36 = arith.constant 0 : index
    %76 = vector.load %arg5[%c200, %c0_36] : memref<256x512xf32, #tpu.memory_space<vmem>>, vector<10x512xf32>
    tpu.vector_store %arg5[%c200, %c0_36], %75 {strides = array<i32>} : memref<256x512xf32, #tpu.memory_space<vmem>>, vector<10x512xf32>,
    %c473_i32 = arith.constant 473 : i32
    %77 = tpu.dynamic_rotate %1 by %c473_i32 dim 1 : vector<16x512xf32>, i32 -> vector<16x512xf32>
    %78 = vector.extract_strided_slice %77 {offsets = [0, 0], sizes = [10, 512], strides = [1, 1]} : vector<16x512xf32> to vector<10x512xf32>
    %c210 = arith.constant 210 : index
    %c0_37 = arith.constant 0 : index
    %79 = vector.load %arg5[%c210, %c0_37] : memref<256x512xf32, #tpu.memory_space<vmem>>, vector<10x512xf32>
    tpu.vector_store %arg5[%c210, %c0_37], %78 {strides = array<i32>} : memref<256x512xf32, #tpu.memory_space<vmem>>, vector<10x512xf32>,
    %c472_i32 = arith.constant 472 : i32
    %80 = tpu.dynamic_rotate %1 by %c472_i32 dim 1 : vector<16x512xf32>, i32 -> vector<16x512xf32>
    %81 = vector.extract_strided_slice %80 {offsets = [0, 0], sizes = [10, 512], strides = [1, 1]} : vector<16x512xf32> to vector<10x512xf32>
    %c220 = arith.constant 220 : index
    %c0_38 = arith.constant 0 : index
    %82 = vector.load %arg5[%c220, %c0_38] : memref<256x512xf32, #tpu.memory_space<vmem>>, vector<10x512xf32>
    tpu.vector_store %arg5[%c220, %c0_38], %81 {strides = array<i32>} : memref<256x512xf32, #tpu.memory_space<vmem>>, vector<10x512xf32>,
    %c471_i32 = arith.constant 471 : i32
    %83 = tpu.dynamic_rotate %1 by %c471_i32 dim 1 : vector<16x512xf32>, i32 -> vector<16x512xf32>
    %84 = vector.extract_strided_slice %83 {offsets = [0, 0], sizes = [10, 512], strides = [1, 1]} : vector<16x512xf32> to vector<10x512xf32>
    %c230 = arith.constant 230 : index
    %c0_39 = arith.constant 0 : index
    %85 = vector.load %arg5[%c230, %c0_39] : memref<256x512xf32, #tpu.memory_space<vmem>>, vector<10x512xf32>
    tpu.vector_store %arg5[%c230, %c0_39], %84 {strides = array<i32>} : memref<256x512xf32, #tpu.memory_space<vmem>>, vector<10x512xf32>,
    %c470_i32 = arith.constant 470 : i32
    %86 = tpu.dynamic_rotate %1 by %c470_i32 dim 1 : vector<16x512xf32>, i32 -> vector<16x512xf32>
    %87 = vector.extract_strided_slice %86 {offsets = [0, 0], sizes = [10, 512], strides = [1, 1]} : vector<16x512xf32> to vector<10x512xf32>
    %c240 = arith.constant 240 : index
    %c0_40 = arith.constant 0 : index
    %88 = vector.load %arg5[%c240, %c0_40] : memref<256x512xf32, #tpu.memory_space<vmem>>, vector<10x512xf32>
    tpu.vector_store %arg5[%c240, %c0_40], %87 {strides = array<i32>} : memref<256x512xf32, #tpu.memory_space<vmem>>, vector<10x512xf32>,
    %c0_41 = arith.constant 0 : index
    %c160_42 = arith.constant 160 : index
    %89 = vector.load %arg2[%c0_41, %c160_42] : memref<16x256xf32, #tpu.memory_space<vmem>>, vector<16x96xf32>
    %c160_43 = arith.constant 160 : index
    %c0_44 = arith.constant 0 : index
    %90 = vector.load %arg5[%c160_43, %c0_44] : memref<256x512xf32, #tpu.memory_space<vmem>>, vector<96x512xf32>
    %cst_45 = arith.constant dense<0.000000e+00> : vector<16x512xf32>
    %91 = tpu.matmul %89, %90, %cst_45 {dimension_numbers = #tpu.dot_dimension_numbers<[1], [0], [0], [1], [0, 0, 1, 1], [], []>} : vector<16x96xf32>, vector<96x512xf32>, vector<16x512xf32> -> vector<16x512xf32>
    %92 = arith.addf %61, %91 : vector<16x512xf32>
    %c0_46 = arith.constant 0 : index
    %c0_47 = arith.constant 0 : index
    %c0_48 = arith.constant 0 : index
    %93 = vector.load %arg4[%c0_46, %c0_47, %c0_48] : memref<1x16x512xf32, #tpu.memory_space<vmem>>, vector<1x16x512xf32>
    %94 = vector.shape_cast %93 : vector<1x16x512xf32> to vector<16x512xf32>
    %95 = vector.shape_cast %92 : vector<16x512xf32> to vector<1x16x512xf32>
    tpu.vector_store %arg4[%c0_46, %c0_47, %c0_48], %95 {strides = array<i32>} : memref<1x16x512xf32, #tpu.memory_space<vmem>>, vector<1x16x512xf32>,
    return
  }
  func.func @transform_0(%arg0: i32) -> (i32, i32, i32) {
    %c0_i32 = arith.constant 0 : i32
    %c0_i32_0 = arith.constant 0 : i32
    %c0_i32_1 = arith.constant 0 : i32
    return %arg0, %c0_i32, %c0_i32_0 : i32, i32, i32
  }
  func.func @transform_1(%arg0: i32) -> (i32, i32) {
    %c0_i32 = arith.constant 0 : i32
    %c0_i32_0 = arith.constant 0 : i32
    %c0_i32_1 = arith.constant 0 : i32
    return %c0_i32, %c0_i32_0 : i32, i32
  }
  func.func @transform_2(%arg0: i32) -> (i32, i32) {
    %c0_i32 = arith.constant 0 : i32
    %c0_i32_0 = arith.constant 0 : i32
    %c0_i32_1 = arith.constant 0 : i32
    return %c0_i32, %c0_i32_0 : i32, i32
  }
  func.func @transform_3(%arg0: i32) -> (i32, i32, i32) {
    %c0_i32 = arith.constant 0 : i32
    %c0_i32_0 = arith.constant 0 : i32
    %c0_i32_1 = arith.constant 0 : i32
    return %arg0, %c0_i32, %c0_i32_0 : i32, i32, i32
  }
}

</mosaic_0001>

<llo_original>
// kernel: tpu_custom_call.1
$region0: #{tpu_custom_call.1}
  #allocation0 [shape = 'u32[]', space=smem, size = 0x4, offset = 0x4, fixed_abs, tag = 'smem constant byte address 0x4 - core index']
  #allocation1 [shape = 'u32[72,128]{1,0:T(1,128)}', space=vmem, size = 0x9000, scoped, tag = 'internal scratch']
  #allocation2 [shape = 'f32[256,512]{1,0:T(8,128)}', space=vmem, size = 0x80000, scoped, tag = 'scratch operand']
  %s0 = inlined_call_operand.hbm [shape: f32[2,16,512], index: 0, kind: input, shape index: {}]
  %s1 = inlined_call_operand.hbm [shape: f32[16,256], index: 1, kind: input, shape index: {}]
  %s2 = inlined_call_operand.vmem [shape: f32[16,1], index: 2, kind: input, shape index: {}]
  %s3 = inlined_call_operand.hbm [shape: f32[2,16,512], index: 3, kind: output, shape index: {}]
  %s4 = sld [smem:[#allocation0]]
  $region53: #{tpu_custom_call.1} parent=0
    _
  %s6 = ssub.s32 1, %s4
  %s7 = scalar_select 0, %s6, %s4
  $region1: #{tpu_custom_call.1} parent=0
    #allocation3 [shape = 'u8[65536]{0}', space=vmem, size = 0x10000, scoped, tag = 'input window, operand 0']
    #allocation4 [shape = 's32[2]{0}', space=sflag, size = 0x8, scoped, tag = 'scoped memory for tpu_custom_call.1']
    #allocation5 [shape = 's32[2]{0}', space=sflag, size = 0x8, scoped, tag = 'scoped memory for tpu_custom_call.1']
    #allocation6 [shape = 'u8[16384]{0}', space=vmem, size = 0x4000, scoped, tag = 'input window, operand 1, single buffered']
    #allocation7 [shape = 's32[1]{0}', space=sflag, size = 0x4, scoped, tag = 'scoped memory for tpu_custom_call.1']
    #allocation8 [shape = 'u8[65536]{0}', space=vmem, size = 0x10000, scoped, tag = 'output window, operand 0']
    %8 = vsyncpa [#allocation4], 0
    %s9 = scalar_lea.sflag [#allocation4], 1
    %10 = vsyncpa %s9, 0
    %11 = vsyncpa [#allocation7], 0
    %12 = vsyncpa [#allocation5], 0
    %s13 = scalar_lea.sflag [#allocation5], 1
    %14 = vsyncpa %s13, 0
    loop: start=0, step=1, limit=4
    $region2: #{tpu_custom_call.1} parent=1 // loop_pre_header
      _
    $region3: #{tpu_custom_call.1} parent=1 // loop_header
      %s16 = sphi 0, %s20
      %p17 = scmp.ge.s32.totalorder %s16, 4
      %s26 = sphi 0, %s28
      %s29 = sphi 0, %s26
      %s30 = sphi 0, %s29
      %s46 = sphi 0, %s30
      %s50 = sphi 0, %s50
      %s52 = sphi 0, %s50
      %s53 = sphi 0, %s52
      %s67 = sphi 0, %s53
      %s71 = sphi 0, %s71
      %s73 = sphi 0, %s71
      %s74 = sphi 0, %s73
      %s88 = sphi 0, %s74
      %s94 = sphi 0, %s96
      %s97 = sphi 0, %s94
      %s98 = sphi 0, %s97
      %s114 = sphi 0, %s98
    $region4: #{tpu_custom_call.1} parent=1 // loop_header_branch
      %19 = sbr.rel (%p17) target = $region8
    $region5: #{tpu_custom_call.1} parent=1 // loop_body
      %s21 = ssub.s32 %s16, 1
      %s22 = ssub.s32 %s16, 2
      %s23 = sadd.s32 %s16, 1
      %s24 = ssub.s32 %s16, %s23
      %p25 = scmp.eq.s32.totalorder %s24, 0
      %s27 = sadd.s32 %s26, 1
      %s28 = scalar_select %p25, %s26, %s27
      %p31 = pneg %p25
      %p32 = scmp.eq.s32.totalorder %s16, 1
      %p33 = por %p31, %p32
      %p34 = scmp.ne.s32.totalorder %s26, %s29
      %p35 = scmp.eq.s32.totalorder %s16, 0
      %p36 = por %p34, %p35
      %p37 = scmp.ne.s32.totalorder %s26, %s29
      %p38 = scmp.eq.s32.totalorder %s21, 1
      %p39 = por %p37, %p38
      %p40 = scmp.ne.s32.totalorder %s29, %s30
      %p41 = scmp.eq.s32.totalorder %s21, 0
      %p42 = por %p40, %p41
      %p43 = scmp.ne.s32.totalorder %s29, %s30
      %p44 = scmp.eq.s32.totalorder %s22, 1
      %p45 = por %p43, %p44
      %p47 = scmp.ne.s32.totalorder %s30, %s46
      %p48 = scmp.eq.s32.totalorder %s22, 0
      %p49 = por %p47, %p48
      %s51 = sadd.s32 %s50, 1
      %p54 = scmp.eq.s32.totalorder %s16, 1
      %p55 = scmp.ne.s32.totalorder %s50, %s52
      %p56 = scmp.eq.s32.totalorder %s16, 0
      %p57 = por %p55, %p56
      %p58 = scmp.ne.s32.totalorder %s50, %s52
      %p59 = scmp.eq.s32.totalorder %s21, 1
      %p60 = por %p58, %p59
      %p61 = scmp.ne.s32.totalorder %s52, %s53
      %p62 = scmp.eq.s32.totalorder %s21, 0
      %p63 = por %p61, %p62
      %p64 = scmp.ne.s32.totalorder %s52, %s53
      %p65 = scmp.eq.s32.totalorder %s22, 1
      %p66 = por %p64, %p65
      %p68 = scmp.ne.s32.totalorder %s53, %s67
      %p69 = scmp.eq.s32.totalorder %s22, 0
      %p70 = por %p68, %p69
      %s72 = sadd.s32 %s71, 1
      %p75 = scmp.eq.s32.totalorder %s16, 1
      %p76 = scmp.ne.s32.totalorder %s71, %s73
      %p77 = scmp.eq.s32.totalorder %s16, 0
      %p78 = por %p76, %p77
      %p79 = scmp.ne.s32.totalorder %s71, %s73
      %p80 = scmp.eq.s32.totalorder %s21, 1
      %p81 = por %p79, %p80
      %p82 = scmp.ne.s32.totalorder %s73, %s74
      %p83 = scmp.eq.s32.totalorder %s21, 0
      %p84 = por %p82, %p83
      %p85 = scmp.ne.s32.totalorder %s73, %s74
      %p86 = scmp.eq.s32.totalorder %s22, 1
      %p87 = por %p85, %p86
      %p89 = scmp.ne.s32.totalorder %s74, %s88
      %p90 = scmp.eq.s32.totalorder %s22, 0
      %p91 = por %p89, %p90
      %s92 = ssub.s32 %s16, %s23
      %p93 = scmp.eq.s32.totalorder %s92, 0
      %s95 = sadd.s32 %s94, 1
      %s96 = scalar_select %p93, %s94, %s95
      %p99 = pneg %p93
      %p100 = scmp.eq.s32.totalorder %s16, 1
      %p101 = por %p99, %p100
      %p102 = scmp.ne.s32.totalorder %s94, %s97
      %p103 = scmp.eq.s32.totalorder %s16, 0
      %p104 = por %p102, %p103
      %p105 = scmp.ne.s32.totalorder %s94, %s97
      %p106 = scmp.eq.s32.totalorder %s21, 1
      %p107 = por %p105, %p106
      %p108 = scmp.ne.s32.totalorder %s97, %s98
      %p109 = scmp.eq.s32.totalorder %s21, 0
      %p110 = por %p108, %p109
      %p111 = scmp.ne.s32.totalorder %s97, %s98
      %p112 = scmp.eq.s32.totalorder %s22, 1
      %p113 = por %p111, %p112
      %p115 = scmp.ne.s32.totalorder %s98, %s114
      %p116 = scmp.eq.s32.totalorder %s22, 0
      %p117 = por %p115, %p116
      %p118 = scmp.le.s32.totalorder 1, %s16
      %p119 = scmp.lt.s32.totalorder %s16, 3
      %p120 = pnand %p118, %p119
      %p121 = pneg %p120
      // Predicated region
      $region9: #{tpu_custom_call.1} parent=5 // pred_check
        _
      $region10: #{tpu_custom_call.1} parent=5 // pred_check_branch
        %123 = sbr.rel (%p120) target = $region12
      $region11: #{tpu_custom_call.1} parent=5 // pred_region
        %s124 = ssub.s32 %s16, 1
        // Predicated region
        $region13: #{tpu_custom_call.1} parent=11 // pred_check
          %p125 = pneg %p63
        $region14: #{tpu_custom_call.1} parent=11 // pred_check_branch
          %127 = sbr.rel (%p125) target = $region16
        $region15: #{tpu_custom_call.1} parent=11 // pred_region
          %129 = vsyncadd [#allocation7], 0
          %s130 = sshll.u32 %s1, 4
          %s131 = int_to_ptr.hbm [resolvable:$true] %s130
          %s132 = sshll.u32 [#allocation6], 4
          %s133 = int_to_ptr.vmem [resolvable:$true] %s132
          %138 = dma.hbm_to_vmem [thread:$0]  %s131, 512, %s133, [#allocation7], 256, 256, 16
        $region16: #{tpu_custom_call.1} parent=11 // pred_fallthru
          _
        // Predicated region
        $region17: #{tpu_custom_call.1} parent=11 // pred_check
          %p139 = pneg %p84
        $region18: #{tpu_custom_call.1} parent=11 // pred_check_branch
          %141 = sbr.rel (%p139) target = $region20
        $region19: #{tpu_custom_call.1} parent=11 // pred_region
          _
        $region20: #{tpu_custom_call.1} parent=11 // pred_fallthru
          _
      $region12: #{tpu_custom_call.1} parent=5 // pred_fallthru
        _
      %p142 = scmp.lt.s32.totalorder %s16, 2
      // Predicated region
      $region21: #{tpu_custom_call.1} parent=5 // pred_check
        %p143 = pneg %p142
      $region22: #{tpu_custom_call.1} parent=5 // pred_check_branch
        %145 = sbr.rel (%p143) target = $region24
      $region23: #{tpu_custom_call.1} parent=5 // pred_region
        // Predicated region
        $region25: #{tpu_custom_call.1} parent=23 // pred_check
          %p146 = pneg %p36
        $region26: #{tpu_custom_call.1} parent=23 // pred_check_branch
          %148 = sbr.rel (%p146) target = $region28
        $region27: #{tpu_custom_call.1} parent=23 // pred_region
          %s149 = sand.u32 %s26, 1
          %s150 = scalar_lea.sflag [#allocation4], %s149
          %s151 = sand.u32 %s26, 1
          %s152 = smul.addr %s151, 64
          %s153 = scalar_lea.vmem [#allocation3], %s152
          %155 = vsyncadd %s150, 0
          %s156 = smul.addr %s16, 8
          %s157 = smul.addr %s156, 8
          %s158 = scalar_lea.hbm %s0, %s157
          %s159 = sshll.u32 %s158, 4
          %s160 = int_to_ptr.hbm [resolvable:$true] %s159
          %s161 = sshll.u32 %s153, 4
          %s162 = int_to_ptr.vmem [resolvable:$true] %s161
          %167 = dma.hbm_to_vmem [thread:$0]  %s160, 1024, %s162, %s150, 512, 512, 32
        $region28: #{tpu_custom_call.1} parent=23 // pred_fallthru
          _
      $region24: #{tpu_custom_call.1} parent=5 // pred_fallthru
        _
      %p168 = scmp.le.s32.totalorder 1, %s16
      %p169 = scmp.lt.s32.totalorder %s16, 3
      %p170 = pnand %p168, %p169
      %p171 = pneg %p170
      // Predicated region
      $region29: #{tpu_custom_call.1} parent=5 // pred_check
        _
      $region30: #{tpu_custom_call.1} parent=5 // pred_check_branch
        %173 = sbr.rel (%p170) target = $region32
      $region31: #{tpu_custom_call.1} parent=5 // pred_region
        %s174 = ssub.s32 %s16, 1
        %s175 = sand.u32 %s29, 1
        %s176 = scalar_lea.sflag [#allocation4], %s175
        %s177 = sand.u32 %s29, 1
        %s178 = smul.addr %s177, 64
        %s179 = scalar_lea.vmem [#allocation3], %s178
        // Predicated region
        $region33: #{tpu_custom_call.1} parent=31 // pred_check
          %p180 = pneg %p42
        $region34: #{tpu_custom_call.1} parent=31 // pred_check_branch
          %182 = sbr.rel (%p180) target = $region36
        $region35: #{tpu_custom_call.1} parent=31 // pred_region
          %184 = dma.done %s176, 1024
        $region36: #{tpu_custom_call.1} parent=31 // pred_fallthru
          _
        // Predicated region
        $region37: #{tpu_custom_call.1} parent=31 // pred_check
          %p185 = pneg %p63
        $region38: #{tpu_custom_call.1} parent=31 // pred_check_branch
          %187 = sbr.rel (%p185) target = $region40
        $region39: #{tpu_custom_call.1} parent=31 // pred_region
          %189 = dma.done [#allocation7], 512
        $region40: #{tpu_custom_call.1} parent=31 // pred_fallthru
          _
        %s190 = sand.u32 %s29, 1
        %s191 = scalar_lea.sflag [#allocation4], %s190
        %s192 = sand.u32 %s29, 1
        %s193 = smul.addr %s192, 64
        %s194 = scalar_lea.vmem [#allocation3], %s193
        %p195 = pneg %p42
        %p196 = pneg %p39
        %p197 = pneg %p63
        %p198 = pneg %p60
        %p199 = pneg %p84
        %p200 = pneg %p81
        %p201 = pneg %p110
        %p202 = pneg %p107
        %s203 = sand.u32 %s97, 1
        %s204 = scalar_lea.sflag [#allocation5], %s203
        %s205 = sand.u32 %s97, 1
        %s206 = smul.addr %s205, 64
        %s207 = scalar_lea.vmem [#allocation8], %s206
        %v208 = vld [vmem:[%s179] sm:$0xff]
        %v209 = vld [vmem:[%s179 + $0x8] sm:$0xff]
        %v210 = vld [vmem:[%s179 + $0x10] sm:$0xff]
        %v211 = vld [vmem:[%s179 + $0x18] sm:$0xff]
        %v212 = vld [vmem:[%s179 + $0x20] sm:$0xff]
        %v213 = vld [vmem:[%s179 + $0x28] sm:$0xff]
        %v214 = vld [vmem:[%s179 + $0x30] sm:$0xff]
        %v215 = vld [vmem:[%s179 + $0x38] sm:$0xff]
        %216 = vst [vmem:[#allocation2 + $0x3e0] sm:$0xfc] 0.0
        %217 = vst [vmem:[#allocation2 + $0x3e8] sm:$0xfc] 0.0
        %218 = vst [vmem:[#allocation2 + $0x3f0] sm:$0xfc] 0.0
        %219 = vst [vmem:[#allocation2 + $0x3f8] sm:$0xfc] 0.0
        %v220 = vld [vmem:[%s2] sm:$0xff]
        %v221 = vld [vmem:[%s2 + $0x8] sm:$0xff]
        %223 = vset.pattern.permute.xlu0 0
        %224 = vperm.xlu0 %223, %v220
        %v225 = vpop.permute.xlu0 %224
        %228 = vset.pattern.permute.xlu0 0
        %229 = vperm.xlu0 %228, %v221
        %v230 = vpop.permute.xlu0 %229
        %v232 = vadd.f32 %v225, %v208
        %v233 = vadd.f32 %v225, %v209
        %v234 = vadd.f32 %v225, %v210
        %v235 = vadd.f32 %v225, %v211
        %v236 = vadd.f32 %v230, %v212
        %v237 = vadd.f32 %v230, %v213
        %v238 = vadd.f32 %v230, %v214
        %v239 = vadd.f32 %v230, %v215
        %240 = vrot.lane.b32.xlu0 %v208, 42
        %v241 = vpop.permute.xlu0 %240
        %242 = vrot.lane.b32.xlu0 %v212, 42
        %v243 = vpop.permute.xlu0 %242
        %244 = vrot.lane.b32.xlu0 %v209, 42
        %v245 = vpop.permute.xlu0 %244
        %246 = vrot.lane.b32.xlu0 %v213, 42
        %v247 = vpop.permute.xlu0 %246
        %248 = vrot.lane.b32.xlu0 %v210, 42
        %v249 = vpop.permute.xlu0 %248
        %250 = vrot.lane.b32.xlu0 %v214, 42
        %v251 = vpop.permute.xlu0 %250
        %252 = vrot.lane.b32.xlu0 %v211, 42
        %v253 = vpop.permute.xlu0 %252
        %254 = vrot.lane.b32.xlu0 %v215, 42
        %v255 = vpop.permute.xlu0 %254
        %v256 = vlaneseq
        %v257 = vand.u32 %v256, 127
        %vm258 = vcmp.lt.s32.totalorder %v257, 42
        %v259 = vsel %vm258, %v249, %v253
        %v260 = vsel %vm258, %v251, %v255
        %v261 = vsel %vm258, %v245, %v249
        %v262 = vsel %vm258, %v247, %v251
        %v263 = vsel %vm258, %v241, %v245
        %v264 = vsel %vm258, %v243, %v247
        %v265 = vsel %vm258, %v253, %v241
        %v266 = vsel %vm258, %v255, %v243
        %267 = vst [vmem:[#allocation2] sm:$0xff] %v265
        %268 = vst [vmem:[#allocation2 + $0x8] sm:$0xff] %v263
        %269 = vst [vmem:[#allocation2 + $0x10] sm:$0xff] %v261
        %270 = vst [vmem:[#allocation2 + $0x18] sm:$0xff] %v259
        %271 = vst [vmem:[#allocation2 + $0x20] sm:$0x3] %v266
        %272 = vst [vmem:[#allocation2 + $0x28] sm:$0x3] %v264
        %273 = vst [vmem:[#allocation2 + $0x30] sm:$0x3] %v262
        %274 = vst [vmem:[#allocation2 + $0x38] sm:$0x3] %v260
        %275 = vrot.lane.b32.xlu0 %v208, 41
        %v276 = vpop.permute.xlu0 %275
        %277 = vrot.lane.b32.xlu0 %v212, 41
        %v278 = vpop.permute.xlu0 %277
        %279 = vrot.lane.b32.xlu0 %v209, 41
        %v280 = vpop.permute.xlu0 %279
        %281 = vrot.lane.b32.xlu0 %v213, 41
        %v282 = vpop.permute.xlu0 %281
        %283 = vrot.lane.b32.xlu0 %v210, 41
        %v284 = vpop.permute.xlu0 %283
        %285 = vrot.lane.b32.xlu0 %v214, 41
        %v286 = vpop.permute.xlu0 %285
        %287 = vrot.lane.b32.xlu0 %v211, 41
        %v288 = vpop.permute.xlu0 %287
        %289 = vrot.lane.b32.xlu0 %v215, 41
        %v290 = vpop.permute.xlu0 %289
        %vm291 = vcmp.lt.s32.totalorder %v257, 41
        %v292 = vsel %vm291, %v284, %v288
        %v293 = vsel %vm291, %v286, %v290
        %v294 = vsel %vm291, %v280, %v284
        %v295 = vsel %vm291, %v282, %v286
        %v296 = vsel %vm291, %v276, %v280
        %v297 = vsel %vm291, %v278, %v282
        %v298 = vsel %vm291, %v288, %v276
        %v299 = vsel %vm291, %v290, %v278
        %vm308 = vcmask 1041408
        %v309 = vrot.slane %v298, 6
        %v310 = vrot.slane %v296, 6
        %v311 = vrot.slane %v294, 6
        %v312 = vrot.slane %v292, 6
        %v313 = vrot.slane %v299, 6
        %v314 = vsel %vm308, %v309, %v313
        %v315 = vrot.slane %v297, 6
        %v316 = vsel %vm308, %v310, %v315
        %v317 = vrot.slane %v295, 6
        %v318 = vsel %vm308, %v311, %v317
        %v319 = vrot.slane %v293, 6
        %v320 = vsel %vm308, %v312, %v319
        %329 = vst [vmem:[#allocation2 + $0x20] sm:$0xfc] %v309
        %330 = vst [vmem:[#allocation2 + $0x28] sm:$0xfc] %v310
        %331 = vst [vmem:[#allocation2 + $0x30] sm:$0xfc] %v311
        %332 = vst [vmem:[#allocation2 + $0x38] sm:$0xfc] %v312
        %333 = vst [vmem:[#allocation2 + $0x40] sm:$0xf] %v314
        %334 = vst [vmem:[#allocation2 + $0x48] sm:$0xf] %v316
        %335 = vst [vmem:[#allocation2 + $0x50] sm:$0xf] %v318
        %336 = vst [vmem:[#allocation2 + $0x58] sm:$0xf] %v320
        %337 = vrot.lane.b32.xlu0 %v208, 40
        %v338 = vpop.permute.xlu0 %337
        %339 = vrot.lane.b32.xlu0 %v212, 40
        %v340 = vpop.permute.xlu0 %339
        %341 = vrot.lane.b32.xlu0 %v209, 40
        %v342 = vpop.permute.xlu0 %341
        %343 = vrot.lane.b32.xlu0 %v213, 40
        %v344 = vpop.permute.xlu0 %343
        %345 = vrot.lane.b32.xlu0 %v210, 40
        %v346 = vpop.permute.xlu0 %345
        %347 = vrot.lane.b32.xlu0 %v214, 40
        %v348 = vpop.permute.xlu0 %347
        %349 = vrot.lane.b32.xlu0 %v211, 40
        %v350 = vpop.permute.xlu0 %349
        %351 = vrot.lane.b32.xlu0 %v215, 40
        %v352 = vpop.permute.xlu0 %351
        %vm353 = vcmp.lt.s32.totalorder %v257, 40
        %v354 = vsel %vm353, %v346, %v350
        %v355 = vsel %vm353, %v348, %v352
        %v356 = vsel %vm353, %v342, %v346
        %v357 = vsel %vm353, %v344, %v348
        %v358 = vsel %vm353, %v338, %v342
        %v359 = vsel %vm353, %v340, %v344
        %v360 = vsel %vm353, %v350, %v338
        %v361 = vsel %vm353, %v352, %v340
        %vm370 = vcmask 1043456
        %v371 = vrot.slane %v360, 4
        %v372 = vrot.slane %v358, 4
        %v373 = vrot.slane %v356, 4
        %v374 = vrot.slane %v354, 4
        %v375 = vrot.slane %v361, 4
        %v376 = vsel %vm370, %v371, %v375
        %v377 = vrot.slane %v359, 4
        %v378 = vsel %vm370, %v372, %v377
        %v379 = vrot.slane %v357, 4
        %v380 = vsel %vm370, %v373, %v379
        %v381 = vrot.slane %v355, 4
        %v382 = vsel %vm370, %v374, %v381
        %391 = vst [vmem:[#allocation2 + $0x40] sm:$0xf0] %v371
        %392 = vst [vmem:[#allocation2 + $0x48] sm:$0xf0] %v372
        %393 = vst [vmem:[#allocation2 + $0x50] sm:$0xf0] %v373
        %394 = vst [vmem:[#allocation2 + $0x58] sm:$0xf0] %v374
        %395 = vst [vmem:[#allocation2 + $0x60] sm:$0x3f] %v376
        %396 = vst [vmem:[#allocation2 + $0x68] sm:$0x3f] %v378
        %397 = vst [vmem:[#allocation2 + $0x70] sm:$0x3f] %v380
        %398 = vst [vmem:[#allocation2 + $0x78] sm:$0x3f] %v382
        %399 = vrot.lane.b32.xlu0 %v208, 39
        %v400 = vpop.permute.xlu0 %399
        %401 = vrot.lane.b32.xlu0 %v212, 39
        %v402 = vpop.permute.xlu0 %401
        %403 = vrot.lane.b32.xlu0 %v209, 39
        %v404 = vpop.permute.xlu0 %403
        %405 = vrot.lane.b32.xlu0 %v213, 39
        %v406 = vpop.permute.xlu0 %405
        %407 = vrot.lane.b32.xlu0 %v210, 39
        %v408 = vpop.permute.xlu0 %407
        %409 = vrot.lane.b32.xlu0 %v214, 39
        %v410 = vpop.permute.xlu0 %409
        %411 = vrot.lane.b32.xlu0 %v211, 39
        %v412 = vpop.permute.xlu0 %411
        %413 = vrot.lane.b32.xlu0 %v215, 39
        %v414 = vpop.permute.xlu0 %413
        %vm415 = vcmp.lt.s32.totalorder %v257, 39
        %v416 = vsel %vm415, %v408, %v412
        %v417 = vsel %vm415, %v410, %v414
        %v418 = vsel %vm415, %v404, %v408
        %v419 = vsel %vm415, %v406, %v410
        %v420 = vsel %vm415, %v400, %v404
        %v421 = vsel %vm415, %v402, %v406
        %v422 = vsel %vm415, %v412, %v400
        %v423 = vsel %vm415, %v414, %v402
        %vm432 = vcmask 1045504
        %v433 = vrot.slane %v422, 2
        %v434 = vrot.slane %v420, 2
        %v435 = vrot.slane %v418, 2
        %v436 = vrot.slane %v416, 2
        %v437 = vrot.slane %v423, 2
        %v438 = vsel %vm432, %v433, %v437
        %v439 = vrot.slane %v421, 2
        %v440 = vsel %vm432, %v434, %v439
        %v441 = vrot.slane %v419, 2
        %v442 = vsel %vm432, %v435, %v441
        %v443 = vrot.slane %v417, 2
        %v444 = vsel %vm432, %v436, %v443
        %453 = vst [vmem:[#allocation2 + $0x60] sm:$0xc0] %v433
        %454 = vst [vmem:[#allocation2 + $0x68] sm:$0xc0] %v434
        %455 = vst [vmem:[#allocation2 + $0x70] sm:$0xc0] %v435
        %456 = vst [vmem:[#allocation2 + $0x78] sm:$0xc0] %v436
        %457 = vst [vmem:[#allocation2 + $0x80] sm:$0xff] %v438
        %458 = vst [vmem:[#allocation2 + $0x88] sm:$0xff] %v440
        %459 = vst [vmem:[#allocation2 + $0x90] sm:$0xff] %v442
        %460 = vst [vmem:[#allocation2 + $0x98] sm:$0xff] %v444
        %461 = vrot.lane.b32.xlu0 %v208, 38
        %v462 = vpop.permute.xlu0 %461
        %463 = vrot.lane.b32.xlu0 %v212, 38
        %v464 = vpop.permute.xlu0 %463
        %465 = vrot.lane.b32.xlu0 %v209, 38
        %v466 = vpop.permute.xlu0 %465
        %467 = vrot.lane.b32.xlu0 %v213, 38
        %v468 = vpop.permute.xlu0 %467
        %469 = vrot.lane.b32.xlu0 %v210, 38
        %v470 = vpop.permute.xlu0 %469
        %471 = vrot.lane.b32.xlu0 %v214, 38
        %v472 = vpop.permute.xlu0 %471
        %473 = vrot.lane.b32.xlu0 %v211, 38
        %v474 = vpop.permute.xlu0 %473
        %475 = vrot.lane.b32.xlu0 %v215, 38
        %v476 = vpop.permute.xlu0 %475
        %vm477 = vcmp.lt.s32.totalorder %v257, 38
        %v478 = vsel %vm477, %v470, %v474
        %v479 = vsel %vm477, %v472, %v476
        %v480 = vsel %vm477, %v466, %v470
        %v481 = vsel %vm477, %v468, %v472
        %v482 = vsel %vm477, %v462, %v466
        %v483 = vsel %vm477, %v464, %v468
        %v484 = vsel %vm477, %v474, %v462
        %v485 = vsel %vm477, %v476, %v464
        %486 = vst [vmem:[#allocation2 + $0xa0] sm:$0xff] %v484
        %487 = vst [vmem:[#allocation2 + $0xa8] sm:$0xff] %v482
        %488 = vst [vmem:[#allocation2 + $0xb0] sm:$0xff] %v480
        %489 = vst [vmem:[#allocation2 + $0xb8] sm:$0xff] %v478
        %490 = vst [vmem:[#allocation2 + $0xc0] sm:$0x3] %v485
        %491 = vst [vmem:[#allocation2 + $0xc8] sm:$0x3] %v483
        %492 = vst [vmem:[#allocation2 + $0xd0] sm:$0x3] %v481
        %493 = vst [vmem:[#allocation2 + $0xd8] sm:$0x3] %v479
        %494 = vrot.lane.b32.xlu0 %v208, 22
        %v495 = vpop.permute.xlu0 %494
        %496 = vrot.lane.b32.xlu0 %v212, 22
        %v497 = vpop.permute.xlu0 %496
        %498 = vrot.lane.b32.xlu0 %v209, 22
        %v499 = vpop.permute.xlu0 %498
        %500 = vrot.lane.b32.xlu0 %v213, 22
        %v501 = vpop.permute.xlu0 %500
        %502 = vrot.lane.b32.xlu0 %v210, 22
        %v503 = vpop.permute.xlu0 %502
        %504 = vrot.lane.b32.xlu0 %v214, 22
        %v505 = vpop.permute.xlu0 %504
        %506 = vrot.lane.b32.xlu0 %v211, 22
        %v507 = vpop.permute.xlu0 %506
        %508 = vrot.lane.b32.xlu0 %v215, 22
        %v509 = vpop.permute.xlu0 %508
        %vm510 = vcmp.lt.s32.totalorder %v257, 22
        %v511 = vsel %vm510, %v503, %v507
        %v512 = vsel %vm510, %v505, %v509
        %v513 = vsel %vm510, %v499, %v503
        %v514 = vsel %vm510, %v501, %v505
        %v515 = vsel %vm510, %v495, %v499
        %v516 = vsel %vm510, %v497, %v501
        %v517 = vsel %vm510, %v507, %v495
        %v518 = vsel %vm510, %v509, %v497
        %v527 = vrot.slane %v517, 6
        %v528 = vrot.slane %v515, 6
        %v529 = vrot.slane %v513, 6
        %v530 = vrot.slane %v511, 6
        %v531 = vrot.slane %v518, 6
        %v532 = vsel %vm308, %v527, %v531
        %v533 = vrot.slane %v516, 6
        %v534 = vsel %vm308, %v528, %v533
        %v535 = vrot.slane %v514, 6
        %v536 = vsel %vm308, %v529, %v535
        %v537 = vrot.slane %v512, 6
        %v538 = vsel %vm308, %v530, %v537
        %547 = vst [vmem:[#allocation2 + $0xc0] sm:$0xfc] %v527
        %548 = vst [vmem:[#allocation2 + $0xc8] sm:$0xfc] %v528
        %549 = vst [vmem:[#allocation2 + $0xd0] sm:$0xfc] %v529
        %550 = vst [vmem:[#allocation2 + $0xd8] sm:$0xfc] %v530
        %551 = vst [vmem:[#allocation2 + $0xe0] sm:$0xf] %v532
        %552 = vst [vmem:[#allocation2 + $0xe8] sm:$0xf] %v534
        %553 = vst [vmem:[#allocation2 + $0xf0] sm:$0xf] %v536
        %554 = vst [vmem:[#allocation2 + $0xf8] sm:$0xf] %v538
        %555 = vrot.lane.b32.xlu0 %v208, 21
        %v556 = vpop.permute.xlu0 %555
        %557 = vrot.lane.b32.xlu0 %v212, 21
        %v558 = vpop.permute.xlu0 %557
        %559 = vrot.lane.b32.xlu0 %v209, 21
        %v560 = vpop.permute.xlu0 %559
        %561 = vrot.lane.b32.xlu0 %v213, 21
        %v562 = vpop.permute.xlu0 %561
        %563 = vrot.lane.b32.xlu0 %v210, 21
        %v564 = vpop.permute.xlu0 %563
        %565 = vrot.lane.b32.xlu0 %v214, 21
        %v566 = vpop.permute.xlu0 %565
        %567 = vrot.lane.b32.xlu0 %v211, 21
        %v568 = vpop.permute.xlu0 %567
        %569 = vrot.lane.b32.xlu0 %v215, 21
        %v570 = vpop.permute.xlu0 %569
        %vm571 = vcmp.lt.s32.totalorder %v257, 21
        %v572 = vsel %vm571, %v564, %v568
        %v573 = vsel %vm571, %v566, %v570
        %v574 = vsel %vm571, %v560, %v564
        %v575 = vsel %vm571, %v562, %v566
        %v576 = vsel %vm571, %v556, %v560
        %v577 = vsel %vm571, %v558, %v562
        %v578 = vsel %vm571, %v568, %v556
        %v579 = vsel %vm571, %v570, %v558
        %v588 = vrot.slane %v578, 4
        %v589 = vrot.slane %v576, 4
        %v590 = vrot.slane %v574, 4
        %v591 = vrot.slane %v572, 4
        %v592 = vrot.slane %v579, 4
        %v593 = vsel %vm370, %v588, %v592
        %v594 = vrot.slane %v577, 4
        %v595 = vsel %vm370, %v589, %v594
        %v596 = vrot.slane %v575, 4
        %v597 = vsel %vm370, %v590, %v596
        %v598 = vrot.slane %v573, 4
        %v599 = vsel %vm370, %v591, %v598
        %608 = vst [vmem:[#allocation2 + $0xe0] sm:$0xf0] %v588
        %609 = vst [vmem:[#allocation2 + $0xe8] sm:$0xf0] %v589
        %610 = vst [vmem:[#allocation2 + $0xf0] sm:$0xf0] %v590
        %611 = vst [vmem:[#allocation2 + $0xf8] sm:$0xf0] %v591
        %612 = vst [vmem:[#allocation2 + $0x100] sm:$0x3f] %v593
        %613 = vst [vmem:[#allocation2 + $0x108] sm:$0x3f] %v595
        %614 = vst [vmem:[#allocation2 + $0x110] sm:$0x3f] %v597
        %615 = vst [vmem:[#allocation2 + $0x118] sm:$0x3f] %v599
        %616 = vrot.lane.b32.xlu0 %v208, 20
        %v617 = vpop.permute.xlu0 %616
        %618 = vrot.lane.b32.xlu0 %v212, 20
        %v619 = vpop.permute.xlu0 %618
        %620 = vrot.lane.b32.xlu0 %v209, 20
        %v621 = vpop.permute.xlu0 %620
        %622 = vrot.lane.b32.xlu0 %v213, 20
        %v623 = vpop.permute.xlu0 %622
        %624 = vrot.lane.b32.xlu0 %v210, 20
        %v625 = vpop.permute.xlu0 %624
        %626 = vrot.lane.b32.xlu0 %v214, 20
        %v627 = vpop.permute.xlu0 %626
        %628 = vrot.lane.b32.xlu0 %v211, 20
        %v629 = vpop.permute.xlu0 %628
        %630 = vrot.lane.b32.xlu0 %v215, 20
        %v631 = vpop.permute.xlu0 %630
        %vm632 = vcmp.lt.s32.totalorder %v257, 20
        %v633 = vsel %vm632, %v625, %v629
        %v634 = vsel %vm632, %v627, %v631
        %v635 = vsel %vm632, %v621, %v625
        %v636 = vsel %vm632, %v623, %v627
        %v637 = vsel %vm632, %v617, %v621
        %v638 = vsel %vm632, %v619, %v623
        %v639 = vsel %vm632, %v629, %v617
        %v640 = vsel %vm632, %v631, %v619
        %v649 = vrot.slane %v639, 2
        %v650 = vrot.slane %v637, 2
        %v651 = vrot.slane %v635, 2
        %v652 = vrot.slane %v633, 2
        %v653 = vrot.slane %v640, 2
        %v654 = vsel %vm432, %v649, %v653
        %v655 = vrot.slane %v638, 2
        %v656 = vsel %vm432, %v650, %v655
        %v657 = vrot.slane %v636, 2
        %v658 = vsel %vm432, %v651, %v657
        %v659 = vrot.slane %v634, 2
        %v660 = vsel %vm432, %v652, %v659
        %669 = vst [vmem:[#allocation2 + $0x100] sm:$0xc0] %v649
        %670 = vst [vmem:[#allocation2 + $0x108] sm:$0xc0] %v650
        %671 = vst [vmem:[#allocation2 + $0x110] sm:$0xc0] %v651
        %672 = vst [vmem:[#allocation2 + $0x118] sm:$0xc0] %v652
        %673 = vst [vmem:[#allocation2 + $0x120] sm:$0xff] %v654
        %674 = vst [vmem:[#allocation2 + $0x128] sm:$0xff] %v656
        %675 = vst [vmem:[#allocation2 + $0x130] sm:$0xff] %v658
        %676 = vst [vmem:[#allocation2 + $0x138] sm:$0xff] %v660
        %v677 = vld [vmem:[#allocation6] sm:$0xff]
        %v678 = vld [vmem:[#allocation6 + $0x10] sm:$0xff]
        %v679 = vld [vmem:[#allocation2] sm:$0xff]
        %v680 = vld [vmem:[#allocation2 + $0x8] sm:$0xff]
        %v681 = vld [vmem:[#allocation2 + $0x10] sm:$0xff]
        %v682 = vld [vmem:[#allocation2 + $0x18] sm:$0xff]
        %v683 = vld [vmem:[#allocation2 + $0x20] sm:$0xff]
        %v684 = vld [vmem:[#allocation2 + $0x28] sm:$0xff]
        %v685 = vld [vmem:[#allocation2 + $0x30] sm:$0xff]
        %v686 = vld [vmem:[#allocation2 + $0x38] sm:$0xff]
        %v687 = vld [vmem:[#allocation2 + $0x40] sm:$0xff]
        %v688 = vld [vmem:[#allocation2 + $0x48] sm:$0xff]
        %v689 = vld [vmem:[#allocation2 + $0x50] sm:$0xff]
        %v690 = vld [vmem:[#allocation2 + $0x58] sm:$0xff]
        %v691 = vld [vmem:[#allocation2 + $0x60] sm:$0xff]
        %v692 = vld [vmem:[#allocation2 + $0x68] sm:$0xff]
        %v693 = vld [vmem:[#allocation2 + $0x70] sm:$0xff]
        %v694 = vld [vmem:[#allocation2 + $0x78] sm:$0xff]
        %v695 = vld [vmem:[#allocation2 + $0x80] sm:$0xff]
        %v696 = vld [vmem:[#allocation2 + $0x88] sm:$0xff]
        %v697 = vld [vmem:[#allocation2 + $0x90] sm:$0xff]
        %v698 = vld [vmem:[#allocation2 + $0x98] sm:$0xff]
        %v699 = vld [vmem:[#allocation2 + $0xa0] sm:$0xff]
        %v700 = vld [vmem:[#allocation2 + $0xa8] sm:$0xff]
        %v701 = vld [vmem:[#allocation2 + $0xb0] sm:$0xff]
        %v702 = vld [vmem:[#allocation2 + $0xb8] sm:$0xff]
        %v703 = vld [vmem:[#allocation2 + $0xc0] sm:$0xff]
        %v704 = vld [vmem:[#allocation2 + $0xc8] sm:$0xff]
        %v705 = vld [vmem:[#allocation2 + $0xd0] sm:$0xff]
        %v706 = vld [vmem:[#allocation2 + $0xd8] sm:$0xff]
        %v707 = vld [vmem:[#allocation2 + $0xe0] sm:$0xff]
        %v708 = vld [vmem:[#allocation2 + $0xe8] sm:$0xff]
        %v709 = vld [vmem:[#allocation2 + $0xf0] sm:$0xff]
        %v710 = vld [vmem:[#allocation2 + $0xf8] sm:$0xff]
        %v711 = vld [vmem:[#allocation2 + $0x100] sm:$0xff]
        %v712 = vld [vmem:[#allocation2 + $0x108] sm:$0xff]
        %v713 = vld [vmem:[#allocation2 + $0x110] sm:$0xff]
        %v714 = vld [vmem:[#allocation2 + $0x118] sm:$0xff]
        %v715 = vld [vmem:[#allocation2 + $0x120] sm:$0xff]
        %v716 = vld [vmem:[#allocation2 + $0x128] sm:$0xff]
        %v717 = vld [vmem:[#allocation2 + $0x130] sm:$0xff]
        %v718 = vld [vmem:[#allocation2 + $0x138] sm:$0xff]
        %vm719 = vcmask 654336
        %v721 = vsel %vm719, %v677, 0
        %v724 = vsel %vm719, %v678, 0
        %726 = vmatpush.msra.mxu0 0.0
        %727 = vmatpush.msra.mxu0 0.0
        %728 = vmatpush.msra.mxu0 0.0
        %729 = vmatpush.msra.mxu0 0.0
        %730 = vmatpush.msra.mxu0 0.0
        %731 = vmatpush.msra.mxu0 0.0
        %732 = vmatpush.msra.mxu0 %v715
        %733 = vmatpush.msra.mxu0 %v711
        %734 = vmatpush.msra.mxu0 %v707
        %735 = vmatpush.msra.mxu0 %v703
        %736 = vmatpush.msra.mxu0 %v699
        %737 = vmatpush.msra.mxu0 %v695
        %738 = vmatpush.msra.mxu0 %v691
        %739 = vmatpush.msra.mxu0 %v687
        %740 = vmatpush.msra.mxu0 %v683
        %741 = vmatpush.msra.mxu0 %v679
        %742 = vmatmul.f32.gmra.mxu0 %v721
        %v743 = vpop.f32.mrf.mxu0
        %v744 = vadd.f32 0.0, %v743
        %745 = vmatmul.f32.gmra.mxu0 %v724
        %v746 = vpop.f32.mrf.mxu0
        %v747 = vadd.f32 0.0, %v746
        %748 = vdwg.mxu0
        %749 = vmatpush.msra.mxu0 0.0
        %750 = vmatpush.msra.mxu0 0.0
        %751 = vmatpush.msra.mxu0 0.0
        %752 = vmatpush.msra.mxu0 0.0
        %753 = vmatpush.msra.mxu0 0.0
        %754 = vmatpush.msra.mxu0 0.0
        %755 = vmatpush.msra.mxu0 %v716
        %756 = vmatpush.msra.mxu0 %v712
        %757 = vmatpush.msra.mxu0 %v708
        %758 = vmatpush.msra.mxu0 %v704
        %759 = vmatpush.msra.mxu0 %v700
        %760 = vmatpush.msra.mxu0 %v696
        %761 = vmatpush.msra.mxu0 %v692
        %762 = vmatpush.msra.mxu0 %v688
        %763 = vmatpush.msra.mxu0 %v684
        %764 = vmatpush.msra.mxu0 %v680
        %765 = vmatmul.f32.gmra.mxu0 %v721
        %v766 = vpop.f32.mrf.mxu0
        %v767 = vadd.f32 0.0, %v766
        %768 = vmatmul.f32.gmra.mxu0 %v724
        %v769 = vpop.f32.mrf.mxu0
        %v770 = vadd.f32 0.0, %v769
        %771 = vdwg.mxu0
        %772 = vmatpush.msra.mxu0 0.0
        %773 = vmatpush.msra.mxu0 0.0
        %774 = vmatpush.msra.mxu0 0.0
        %775 = vmatpush.msra.mxu0 0.0
        %776 = vmatpush.msra.mxu0 0.0
        %777 = vmatpush.msra.mxu0 0.0
        %778 = vmatpush.msra.mxu0 %v717
        %779 = vmatpush.msra.mxu0 %v713
        %780 = vmatpush.msra.mxu0 %v709
        %781 = vmatpush.msra.mxu0 %v705
        %782 = vmatpush.msra.mxu0 %v701
        %783 = vmatpush.msra.mxu0 %v697
        %784 = vmatpush.msra.mxu0 %v693
        %785 = vmatpush.msra.mxu0 %v689
        %786 = vmatpush.msra.mxu0 %v685
        %787 = vmatpush.msra.mxu0 %v681
        %788 = vmatmul.f32.gmra.mxu0 %v721
        %v789 = vpop.f32.mrf.mxu0
        %v790 = vadd.f32 0.0, %v789
        %791 = vmatmul.f32.gmra.mxu0 %v724
        %v792 = vpop.f32.mrf.mxu0
        %v793 = vadd.f32 0.0, %v792
        %794 = vdwg.mxu0
        %795 = vmatpush.msra.mxu0 0.0
        %796 = vmatpush.msra.mxu0 0.0
        %797 = vmatpush.msra.mxu0 0.0
        %798 = vmatpush.msra.mxu0 0.0
        %799 = vmatpush.msra.mxu0 0.0
        %800 = vmatpush.msra.mxu0 0.0
        %801 = vmatpush.msra.mxu0 %v718
        %802 = vmatpush.msra.mxu0 %v714
        %803 = vmatpush.msra.mxu0 %v710
        %804 = vmatpush.msra.mxu0 %v706
        %805 = vmatpush.msra.mxu0 %v702
        %806 = vmatpush.msra.mxu0 %v698
        %807 = vmatpush.msra.mxu0 %v694
        %808 = vmatpush.msra.mxu0 %v690
        %809 = vmatpush.msra.mxu0 %v686
        %810 = vmatpush.msra.mxu0 %v682
        %811 = vmatmul.f32.gmra.mxu0 %v721
        %v812 = vpop.f32.mrf.mxu0
        %v813 = vadd.f32 0.0, %v812
        %814 = vmatmul.f32.gmra.mxu0 %v724
        %v815 = vpop.f32.mrf.mxu0
        %v816 = vadd.f32 0.0, %v815
        %817 = vdwg.mxu0
        %v818 = vadd.f32 %v232, %v744
        %v819 = vadd.f32 %v233, %v767
        %v820 = vadd.f32 %v234, %v790
        %v821 = vadd.f32 %v235, %v813
        %v822 = vadd.f32 %v236, %v747
        %v823 = vadd.f32 %v237, %v770
        %v824 = vadd.f32 %v238, %v793
        %v825 = vadd.f32 %v239, %v816
        %826 = vrot.lane.b32.xlu0 %v208, 19
        %v827 = vpop.permute.xlu0 %826
        %828 = vrot.lane.b32.xlu0 %v212, 19
        %v829 = vpop.permute.xlu0 %828
        %830 = vrot.lane.b32.xlu0 %v209, 19
        %v831 = vpop.permute.xlu0 %830
        %832 = vrot.lane.b32.xlu0 %v213, 19
        %v833 = vpop.permute.xlu0 %832
        %834 = vrot.lane.b32.xlu0 %v210, 19
        %v835 = vpop.permute.xlu0 %834
        %836 = vrot.lane.b32.xlu0 %v214, 19
        %v837 = vpop.permute.xlu0 %836
        %838 = vrot.lane.b32.xlu0 %v211, 19
        %v839 = vpop.permute.xlu0 %838
        %840 = vrot.lane.b32.xlu0 %v215, 19
        %v841 = vpop.permute.xlu0 %840
        %vm842 = vcmp.lt.s32.totalorder %v257, 19
        %v843 = vsel %vm842, %v835, %v839
        %v844 = vsel %vm842, %v837, %v841
        %v845 = vsel %vm842, %v831, %v835
        %v846 = vsel %vm842, %v833, %v837
        %v847 = vsel %vm842, %v827, %v831
        %v848 = vsel %vm842, %v829, %v833
        %v849 = vsel %vm842, %v839, %v827
        %v850 = vsel %vm842, %v841, %v829
        %851 = vst [vmem:[#allocation2 + $0x140] sm:$0xff] %v849
        %852 = vst [vmem:[#allocation2 + $0x148] sm:$0xff] %v847
        %853 = vst [vmem:[#allocation2 + $0x150] sm:$0xff] %v845
        %854 = vst [vmem:[#allocation2 + $0x158] sm:$0xff] %v843
        %855 = vst [vmem:[#allocation2 + $0x160] sm:$0x3] %v850
        %856 = vst [vmem:[#allocation2 + $0x168] sm:$0x3] %v848
        %857 = vst [vmem:[#allocation2 + $0x170] sm:$0x3] %v846
        %858 = vst [vmem:[#allocation2 + $0x178] sm:$0x3] %v844
        %859 = vrot.lane.b32.xlu0 %v208, 18
        %v860 = vpop.permute.xlu0 %859
        %861 = vrot.lane.b32.xlu0 %v212, 18
        %v862 = vpop.permute.xlu0 %861
        %863 = vrot.lane.b32.xlu0 %v209, 18
        %v864 = vpop.permute.xlu0 %863
        %865 = vrot.lane.b32.xlu0 %v213, 18
        %v866 = vpop.permute.xlu0 %865
        %867 = vrot.lane.b32.xlu0 %v210, 18
        %v868 = vpop.permute.xlu0 %867
        %869 = vrot.lane.b32.xlu0 %v214, 18
        %v870 = vpop.permute.xlu0 %869
        %871 = vrot.lane.b32.xlu0 %v211, 18
        %v872 = vpop.permute.xlu0 %871
        %873 = vrot.lane.b32.xlu0 %v215, 18
        %v874 = vpop.permute.xlu0 %873
        %vm875 = vcmp.lt.s32.totalorder %v257, 18
        %v876 = vsel %vm875, %v868, %v872
        %v877 = vsel %vm875, %v870, %v874
        %v878 = vsel %vm875, %v864, %v868
        %v879 = vsel %vm875, %v866, %v870
        %v880 = vsel %vm875, %v860, %v864
        %v881 = vsel %vm875, %v862, %v866
        %v882 = vsel %vm875, %v872, %v860
        %v883 = vsel %vm875, %v874, %v862
        %v892 = vrot.slane %v882, 6
        %v893 = vrot.slane %v880, 6
        %v894 = vrot.slane %v878, 6
        %v895 = vrot.slane %v876, 6
        %v896 = vrot.slane %v883, 6
        %v897 = vsel %vm308, %v892, %v896
        %v898 = vrot.slane %v881, 6
        %v899 = vsel %vm308, %v893, %v898
        %v900 = vrot.slane %v879, 6
        %v901 = vsel %vm308, %v894, %v900
        %v902 = vrot.slane %v877, 6
        %v903 = vsel %vm308, %v895, %v902
        %912 = vst [vmem:[#allocation2 + $0x160] sm:$0xfc] %v892
        %913 = vst [vmem:[#allocation2 + $0x168] sm:$0xfc] %v893
        %914 = vst [vmem:[#allocation2 + $0x170] sm:$0xfc] %v894
        %915 = vst [vmem:[#allocation2 + $0x178] sm:$0xfc] %v895
        %916 = vst [vmem:[#allocation2 + $0x180] sm:$0xf] %v897
        %917 = vst [vmem:[#allocation2 + $0x188] sm:$0xf] %v899
        %918 = vst [vmem:[#allocation2 + $0x190] sm:$0xf] %v901
        %919 = vst [vmem:[#allocation2 + $0x198] sm:$0xf] %v903
        %920 = vrot.lane.b32.xlu0 %v208, 2
        %v921 = vpop.permute.xlu0 %920
        %922 = vrot.lane.b32.xlu0 %v212, 2
        %v923 = vpop.permute.xlu0 %922
        %924 = vrot.lane.b32.xlu0 %v209, 2
        %v925 = vpop.permute.xlu0 %924
        %926 = vrot.lane.b32.xlu0 %v213, 2
        %v927 = vpop.permute.xlu0 %926
        %928 = vrot.lane.b32.xlu0 %v210, 2
        %v929 = vpop.permute.xlu0 %928
        %930 = vrot.lane.b32.xlu0 %v214, 2
        %v931 = vpop.permute.xlu0 %930
        %932 = vrot.lane.b32.xlu0 %v211, 2
        %v933 = vpop.permute.xlu0 %932
        %934 = vrot.lane.b32.xlu0 %v215, 2
        %v935 = vpop.permute.xlu0 %934
        %vm936 = vcmp.lt.s32.totalorder %v257, 2
        %v937 = vsel %vm936, %v929, %v933
        %v938 = vsel %vm936, %v931, %v935
        %v939 = vsel %vm936, %v925, %v929
        %v940 = vsel %vm936, %v927, %v931
        %v941 = vsel %vm936, %v921, %v925
        %v942 = vsel %vm936, %v923, %v927
        %v943 = vsel %vm936, %v933, %v921
        %v944 = vsel %vm936, %v935, %v923
        %v953 = vrot.slane %v943, 4
        %v954 = vrot.slane %v941, 4
        %v955 = vrot.slane %v939, 4
        %v956 = vrot.slane %v937, 4
        %v957 = vrot.slane %v944, 4
        %v958 = vsel %vm370, %v953, %v957
        %v959 = vrot.slane %v942, 4
        %v960 = vsel %vm370, %v954, %v959
        %v961 = vrot.slane %v940, 4
        %v962 = vsel %vm370, %v955, %v961
        %v963 = vrot.slane %v938, 4
        %v964 = vsel %vm370, %v956, %v963
        %973 = vst [vmem:[#allocation2 + $0x180] sm:$0xf0] %v953
        %974 = vst [vmem:[#allocation2 + $0x188] sm:$0xf0] %v954
        %975 = vst [vmem:[#allocation2 + $0x190] sm:$0xf0] %v955
        %976 = vst [vmem:[#allocation2 + $0x198] sm:$0xf0] %v956
        %977 = vst [vmem:[#allocation2 + $0x1a0] sm:$0x3f] %v958
        %978 = vst [vmem:[#allocation2 + $0x1a8] sm:$0x3f] %v960
        %979 = vst [vmem:[#allocation2 + $0x1b0] sm:$0x3f] %v962
        %980 = vst [vmem:[#allocation2 + $0x1b8] sm:$0x3f] %v964
        %981 = vrot.lane.b32.xlu0 %v208, 1
        %v982 = vpop.permute.xlu0 %981
        %983 = vrot.lane.b32.xlu0 %v212, 1
        %v984 = vpop.permute.xlu0 %983
        %985 = vrot.lane.b32.xlu0 %v209, 1
        %v986 = vpop.permute.xlu0 %985
        %987 = vrot.lane.b32.xlu0 %v213, 1
        %v988 = vpop.permute.xlu0 %987
        %989 = vrot.lane.b32.xlu0 %v210, 1
        %v990 = vpop.permute.xlu0 %989
        %991 = vrot.lane.b32.xlu0 %v214, 1
        %v992 = vpop.permute.xlu0 %991
        %993 = vrot.lane.b32.xlu0 %v211, 1
        %v994 = vpop.permute.xlu0 %993
        %995 = vrot.lane.b32.xlu0 %v215, 1
        %v996 = vpop.permute.xlu0 %995
        %vm997 = vcmp.lt.s32.totalorder %v257, 1
        %v998 = vsel %vm997, %v990, %v994
        %v999 = vsel %vm997, %v992, %v996
        %v1000 = vsel %vm997, %v986, %v990
        %v1001 = vsel %vm997, %v988, %v992
        %v1002 = vsel %vm997, %v982, %v986
        %v1003 = vsel %vm997, %v984, %v988
        %v1004 = vsel %vm997, %v994, %v982
        %v1005 = vsel %vm997, %v996, %v984
        %v1014 = vrot.slane %v1004, 2
        %v1015 = vrot.slane %v1002, 2
        %v1016 = vrot.slane %v1000, 2
        %v1017 = vrot.slane %v998, 2
        %v1018 = vrot.slane %v1005, 2
        %v1019 = vsel %vm432, %v1014, %v1018
        %v1020 = vrot.slane %v1003, 2
        %v1021 = vsel %vm432, %v1015, %v1020
        %v1022 = vrot.slane %v1001, 2
        %v1023 = vsel %vm432, %v1016, %v1022
        %v1024 = vrot.slane %v999, 2
        %v1025 = vsel %vm432, %v1017, %v1024
        %1034 = vst [vmem:[#allocation2 + $0x1a0] sm:$0xc0] %v1014
        %1035 = vst [vmem:[#allocation2 + $0x1a8] sm:$0xc0] %v1015
        %1036 = vst [vmem:[#allocation2 + $0x1b0] sm:$0xc0] %v1016
        %1037 = vst [vmem:[#allocation2 + $0x1b8] sm:$0xc0] %v1017
        %1038 = vst [vmem:[#allocation2 + $0x1c0] sm:$0xff] %v1019
        %1039 = vst [vmem:[#allocation2 + $0x1c8] sm:$0xff] %v1021
        %1040 = vst [vmem:[#allocation2 + $0x1d0] sm:$0xff] %v1023
        %1041 = vst [vmem:[#allocation2 + $0x1d8] sm:$0xff] %v1025
        %1042 = vst [vmem:[#allocation2 + $0x1e0] sm:$0xff] %v208
        %1043 = vst [vmem:[#allocation2 + $0x1e8] sm:$0xff] %v209
        %1044 = vst [vmem:[#allocation2 + $0x1f0] sm:$0xff] %v210
        %1045 = vst [vmem:[#allocation2 + $0x1f8] sm:$0xff] %v211
        %1046 = vst [vmem:[#allocation2 + $0x200] sm:$0x3] %v212
        %1047 = vst [vmem:[#allocation2 + $0x208] sm:$0x3] %v213
        %1048 = vst [vmem:[#allocation2 + $0x210] sm:$0x3] %v214
        %1049 = vst [vmem:[#allocation2 + $0x218] sm:$0x3] %v215
        %1050 = vrot.lane.b32.xlu0 %v208, 127
        %v1051 = vpop.permute.xlu0 %1050
        %1052 = vrot.lane.b32.xlu0 %v212, 127
        %v1053 = vpop.permute.xlu0 %1052
        %1054 = vrot.lane.b32.xlu0 %v209, 127
        %v1055 = vpop.permute.xlu0 %1054
        %1056 = vrot.lane.b32.xlu0 %v213, 127
        %v1057 = vpop.permute.xlu0 %1056
        %1058 = vrot.lane.b32.xlu0 %v210, 127
        %v1059 = vpop.permute.xlu0 %1058
        %1060 = vrot.lane.b32.xlu0 %v214, 127
        %v1061 = vpop.permute.xlu0 %1060
        %1062 = vrot.lane.b32.xlu0 %v211, 127
        %v1063 = vpop.permute.xlu0 %1062
        %1064 = vrot.lane.b32.xlu0 %v215, 127
        %v1065 = vpop.permute.xlu0 %1064
        %vm1066 = vcmp.lt.s32.totalorder %v257, 127
        %v1067 = vsel %vm1066, %v1059, %v1063
        %v1068 = vsel %vm1066, %v1061, %v1065
        %v1069 = vsel %vm1066, %v1055, %v1059
        %v1070 = vsel %vm1066, %v1057, %v1061
        %v1071 = vsel %vm1066, %v1051, %v1055
        %v1072 = vsel %vm1066, %v1053, %v1057
        %v1073 = vsel %vm1066, %v1063, %v1051
        %v1074 = vsel %vm1066, %v1065, %v1053
        %v1083 = vrot.slane %v1071, 6
        %v1084 = vrot.slane %v1069, 6
        %v1085 = vrot.slane %v1067, 6
        %v1086 = vrot.slane %v1073, 6
        %v1087 = vrot.slane %v1072, 6
        %v1088 = vsel %vm308, %v1083, %v1087
        %v1089 = vrot.slane %v1070, 6
        %v1090 = vsel %vm308, %v1084, %v1089
        %v1091 = vrot.slane %v1068, 6
        %v1092 = vsel %vm308, %v1085, %v1091
        %v1093 = vrot.slane %v1074, 6
        %v1094 = vsel %vm308, %v1086, %v1093
        %1103 = vst [vmem:[#allocation2 + $0x200] sm:$0xfc] %v1083
        %1104 = vst [vmem:[#allocation2 + $0x208] sm:$0xfc] %v1084
        %1105 = vst [vmem:[#allocation2 + $0x210] sm:$0xfc] %v1085
        %1106 = vst [vmem:[#allocation2 + $0x218] sm:$0xfc] %v1086
        %1107 = vst [vmem:[#allocation2 + $0x220] sm:$0xf] %v1088
        %1108 = vst [vmem:[#allocation2 + $0x228] sm:$0xf] %v1090
        %1109 = vst [vmem:[#allocation2 + $0x230] sm:$0xf] %v1092
        %1110 = vst [vmem:[#allocation2 + $0x238] sm:$0xf] %v1094
        %1111 = vrot.lane.b32.xlu0 %v208, 126
        %v1112 = vpop.permute.xlu0 %1111
        %1113 = vrot.lane.b32.xlu0 %v212, 126
        %v1114 = vpop.permute.xlu0 %1113
        %1115 = vrot.lane.b32.xlu0 %v209, 126
        %v1116 = vpop.permute.xlu0 %1115
        %1117 = vrot.lane.b32.xlu0 %v213, 126
        %v1118 = vpop.permute.xlu0 %1117
        %1119 = vrot.lane.b32.xlu0 %v210, 126
        %v1120 = vpop.permute.xlu0 %1119
        %1121 = vrot.lane.b32.xlu0 %v214, 126
        %v1122 = vpop.permute.xlu0 %1121
        %1123 = vrot.lane.b32.xlu0 %v211, 126
        %v1124 = vpop.permute.xlu0 %1123
        %1125 = vrot.lane.b32.xlu0 %v215, 126
        %v1126 = vpop.permute.xlu0 %1125
        %vm1127 = vcmp.lt.s32.totalorder %v257, 126
        %v1128 = vsel %vm1127, %v1120, %v1124
        %v1129 = vsel %vm1127, %v1122, %v1126
        %v1130 = vsel %vm1127, %v1116, %v1120
        %v1131 = vsel %vm1127, %v1118, %v1122
        %v1132 = vsel %vm1127, %v1112, %v1116
        %v1133 = vsel %vm1127, %v1114, %v1118
        %v1134 = vsel %vm1127, %v1124, %v1112
        %v1135 = vsel %vm1127, %v1126, %v1114
        %v1144 = vrot.slane %v1132, 4
        %v1145 = vrot.slane %v1130, 4
        %v1146 = vrot.slane %v1128, 4
        %v1147 = vrot.slane %v1134, 4
        %v1148 = vrot.slane %v1133, 4
        %v1149 = vsel %vm370, %v1144, %v1148
        %v1150 = vrot.slane %v1131, 4
        %v1151 = vsel %vm370, %v1145, %v1150
        %v1152 = vrot.slane %v1129, 4
        %v1153 = vsel %vm370, %v1146, %v1152
        %v1154 = vrot.slane %v1135, 4
        %v1155 = vsel %vm370, %v1147, %v1154
        %1164 = vst [vmem:[#allocation2 + $0x220] sm:$0xf0] %v1144
        %1165 = vst [vmem:[#allocation2 + $0x228] sm:$0xf0] %v1145
        %1166 = vst [vmem:[#allocation2 + $0x230] sm:$0xf0] %v1146
        %1167 = vst [vmem:[#allocation2 + $0x238] sm:$0xf0] %v1147
        %1168 = vst [vmem:[#allocation2 + $0x240] sm:$0x3f] %v1149
        %1169 = vst [vmem:[#allocation2 + $0x248] sm:$0x3f] %v1151
        %1170 = vst [vmem:[#allocation2 + $0x250] sm:$0x3f] %v1153
        %1171 = vst [vmem:[#allocation2 + $0x258] sm:$0x3f] %v1155
        %1172 = vrot.lane.b32.xlu0 %v208, 110
        %v1173 = vpop.permute.xlu0 %1172
        %1174 = vrot.lane.b32.xlu0 %v212, 110
        %v1175 = vpop.permute.xlu0 %1174
        %1176 = vrot.lane.b32.xlu0 %v209, 110
        %v1177 = vpop.permute.xlu0 %1176
        %1178 = vrot.lane.b32.xlu0 %v213, 110
        %v1179 = vpop.permute.xlu0 %1178
        %1180 = vrot.lane.b32.xlu0 %v210, 110
        %v1181 = vpop.permute.xlu0 %1180
        %1182 = vrot.lane.b32.xlu0 %v214, 110
        %v1183 = vpop.permute.xlu0 %1182
        %1184 = vrot.lane.b32.xlu0 %v211, 110
        %v1185 = vpop.permute.xlu0 %1184
        %1186 = vrot.lane.b32.xlu0 %v215, 110
        %v1187 = vpop.permute.xlu0 %1186
        %vm1188 = vcmp.lt.s32.totalorder %v257, 110
        %v1189 = vsel %vm1188, %v1181, %v1185
        %v1190 = vsel %vm1188, %v1183, %v1187
        %v1191 = vsel %vm1188, %v1177, %v1181
        %v1192 = vsel %vm1188, %v1179, %v1183
        %v1193 = vsel %vm1188, %v1173, %v1177
        %v1194 = vsel %vm1188, %v1175, %v1179
        %v1195 = vsel %vm1188, %v1185, %v1173
        %v1196 = vsel %vm1188, %v1187, %v1175
        %v1205 = vrot.slane %v1193, 2
        %v1206 = vrot.slane %v1191, 2
        %v1207 = vrot.slane %v1189, 2
        %v1208 = vrot.slane %v1195, 2
        %v1209 = vrot.slane %v1194, 2
        %v1210 = vsel %vm432, %v1205, %v1209
        %v1211 = vrot.slane %v1192, 2
        %v1212 = vsel %vm432, %v1206, %v1211
        %v1213 = vrot.slane %v1190, 2
        %v1214 = vsel %vm432, %v1207, %v1213
        %v1215 = vrot.slane %v1196, 2
        %v1216 = vsel %vm432, %v1208, %v1215
        %1225 = vst [vmem:[#allocation2 + $0x240] sm:$0xc0] %v1205
        %1226 = vst [vmem:[#allocation2 + $0x248] sm:$0xc0] %v1206
        %1227 = vst [vmem:[#allocation2 + $0x250] sm:$0xc0] %v1207
        %1228 = vst [vmem:[#allocation2 + $0x258] sm:$0xc0] %v1208
        %1229 = vst [vmem:[#allocation2 + $0x260] sm:$0xff] %v1210
        %1230 = vst [vmem:[#allocation2 + $0x268] sm:$0xff] %v1212
        %1231 = vst [vmem:[#allocation2 + $0x270] sm:$0xff] %v1214
        %1232 = vst [vmem:[#allocation2 + $0x278] sm:$0xff] %v1216
        %v1233 = vld [vmem:[#allocation6] sm:$0xff]
        %v1234 = vld [vmem:[#allocation6 + $0x8] sm:$0xff]
        %v1235 = vld [vmem:[#allocation6 + $0x10] sm:$0xff]
        %v1236 = vld [vmem:[#allocation6 + $0x18] sm:$0xff]
        %v1237 = vld [vmem:[#allocation2 + $0x140] sm:$0xff]
        %v1238 = vld [vmem:[#allocation2 + $0x148] sm:$0xff]
        %v1239 = vld [vmem:[#allocation2 + $0x150] sm:$0xff]
        %v1240 = vld [vmem:[#allocation2 + $0x158] sm:$0xff]
        %v1241 = vld [vmem:[#allocation2 + $0x160] sm:$0xff]
        %v1242 = vld [vmem:[#allocation2 + $0x168] sm:$0xff]
        %v1243 = vld [vmem:[#allocation2 + $0x170] sm:$0xff]
        %v1244 = vld [vmem:[#allocation2 + $0x178] sm:$0xff]
        %v1245 = vld [vmem:[#allocation2 + $0x180] sm:$0xff]
        %v1246 = vld [vmem:[#allocation2 + $0x188] sm:$0xff]
        %v1247 = vld [vmem:[#allocation2 + $0x190] sm:$0xff]
        %v1248 = vld [vmem:[#allocation2 + $0x198] sm:$0xff]
        %v1249 = vld [vmem:[#allocation2 + $0x1a0] sm:$0xff]
        %v1250 = vld [vmem:[#allocation2 + $0x1a8] sm:$0xff]
        %v1251 = vld [vmem:[#allocation2 + $0x1b0] sm:$0xff]
        %v1252 = vld [vmem:[#allocation2 + $0x1b8] sm:$0xff]
        %v1253 = vld [vmem:[#allocation2 + $0x1c0] sm:$0xff]
        %v1254 = vld [vmem:[#allocation2 + $0x1c8] sm:$0xff]
        %v1255 = vld [vmem:[#allocation2 + $0x1d0] sm:$0xff]
        %v1256 = vld [vmem:[#allocation2 + $0x1d8] sm:$0xff]
        %v1257 = vld [vmem:[#allocation2 + $0x1e0] sm:$0xff]
        %v1258 = vld [vmem:[#allocation2 + $0x1e8] sm:$0xff]
        %v1259 = vld [vmem:[#allocation2 + $0x1f0] sm:$0xff]
        %v1260 = vld [vmem:[#allocation2 + $0x1f8] sm:$0xff]
        %v1261 = vld [vmem:[#allocation2 + $0x200] sm:$0xff]
        %v1262 = vld [vmem:[#allocation2 + $0x208] sm:$0xff]
        %v1263 = vld [vmem:[#allocation2 + $0x210] sm:$0xff]
        %v1264 = vld [vmem:[#allocation2 + $0x218] sm:$0xff]
        %v1265 = vld [vmem:[#allocation2 + $0x220] sm:$0xff]
        %v1266 = vld [vmem:[#allocation2 + $0x228] sm:$0xff]
        %v1267 = vld [vmem:[#allocation2 + $0x230] sm:$0xff]
        %v1268 = vld [vmem:[#allocation2 + $0x238] sm:$0xff]
        %v1269 = vld [vmem:[#allocation2 + $0x240] sm:$0xff]
        %v1270 = vld [vmem:[#allocation2 + $0x248] sm:$0xff]
        %v1271 = vld [vmem:[#allocation2 + $0x250] sm:$0xff]
        %v1272 = vld [vmem:[#allocation2 + $0x258] sm:$0xff]
        %v1273 = vld [vmem:[#allocation2 + $0x260] sm:$0xff]
        %v1274 = vld [vmem:[#allocation2 + $0x268] sm:$0xff]
        %v1275 = vld [vmem:[#allocation2 + $0x270] sm:$0xff]
        %v1276 = vld [vmem:[#allocation2 + $0x278] sm:$0xff]
        %1281 = vrot.lane.b32.xlu0 %v1233, 48
        %v1282 = vpop.permute.xlu0 %1281
        %1283 = vrot.lane.b32.xlu0 %v1234, 48
        %v1284 = vpop.permute.xlu0 %1283
        %1285 = vrot.lane.b32.xlu0 %v1235, 48
        %v1286 = vpop.permute.xlu0 %1285
        %1287 = vrot.lane.b32.xlu0 %v1236, 48
        %v1288 = vpop.permute.xlu0 %1287
        %vm1289 = vcmask 392192
        %v1290 = vsel %vm1289, %v1282, %v1284
        %v1291 = vsel %vm1289, %v1286, %v1288
        %v1292 = vsel %vm719, %v1290, 0
        %v1294 = vsel %vm719, %v1291, 0
        %1296 = vmatpush.msra.mxu0 0.0
        %1297 = vmatpush.msra.mxu0 0.0
        %1298 = vmatpush.msra.mxu0 0.0
        %1299 = vmatpush.msra.mxu0 0.0
        %1300 = vmatpush.msra.mxu0 0.0
        %1301 = vmatpush.msra.mxu0 0.0
        %1302 = vmatpush.msra.mxu0 %v1273
        %1303 = vmatpush.msra.mxu0 %v1269
        %1304 = vmatpush.msra.mxu0 %v1265
        %1305 = vmatpush.msra.mxu0 %v1261
        %1306 = vmatpush.msra.mxu0 %v1257
        %1307 = vmatpush.msra.mxu0 %v1253
        %1308 = vmatpush.msra.mxu0 %v1249
        %1309 = vmatpush.msra.mxu0 %v1245
        %1310 = vmatpush.msra.mxu0 %v1241
        %1311 = vmatpush.msra.mxu0 %v1237
        %1312 = vmatmul.f32.gmra.mxu0 %v1292
        %v1313 = vpop.f32.mrf.mxu0
        %v1314 = vadd.f32 0.0, %v1313
        %1315 = vmatmul.f32.gmra.mxu0 %v1294
        %v1316 = vpop.f32.mrf.mxu0
        %v1317 = vadd.f32 0.0, %v1316
        %1318 = vdwg.mxu0
        %1319 = vmatpush.msra.mxu0 0.0
        %1320 = vmatpush.msra.mxu0 0.0
        %1321 = vmatpush.msra.mxu0 0.0
        %1322 = vmatpush.msra.mxu0 0.0
        %1323 = vmatpush.msra.mxu0 0.0
        %1324 = vmatpush.msra.mxu0 0.0
        %1325 = vmatpush.msra.mxu0 %v1274
        %1326 = vmatpush.msra.mxu0 %v1270
        %1327 = vmatpush.msra.mxu0 %v1266
        %1328 = vmatpush.msra.mxu0 %v1262
        %1329 = vmatpush.msra.mxu0 %v1258
        %1330 = vmatpush.msra.mxu0 %v1254
        %1331 = vmatpush.msra.mxu0 %v1250
        %1332 = vmatpush.msra.mxu0 %v1246
        %1333 = vmatpush.msra.mxu0 %v1242
        %1334 = vmatpush.msra.mxu0 %v1238
        %1335 = vmatmul.f32.gmra.mxu0 %v1292
        %v1336 = vpop.f32.mrf.mxu0
        %v1337 = vadd.f32 0.0, %v1336
        %1338 = vmatmul.f32.gmra.mxu0 %v1294
        %v1339 = vpop.f32.mrf.mxu0
        %v1340 = vadd.f32 0.0, %v1339
        %1341 = vdwg.mxu0
        %1342 = vmatpush.msra.mxu0 0.0
        %1343 = vmatpush.msra.mxu0 0.0
        %1344 = vmatpush.msra.mxu0 0.0
        %1345 = vmatpush.msra.mxu0 0.0
        %1346 = vmatpush.msra.mxu0 0.0
        %1347 = vmatpush.msra.mxu0 0.0
        %1348 = vmatpush.msra.mxu0 %v1275
        %1349 = vmatpush.msra.mxu0 %v1271
        %1350 = vmatpush.msra.mxu0 %v1267
        %1351 = vmatpush.msra.mxu0 %v1263
        %1352 = vmatpush.msra.mxu0 %v1259
        %1353 = vmatpush.msra.mxu0 %v1255
        %1354 = vmatpush.msra.mxu0 %v1251
        %1355 = vmatpush.msra.mxu0 %v1247
        %1356 = vmatpush.msra.mxu0 %v1243
        %1357 = vmatpush.msra.mxu0 %v1239
        %1358 = vmatmul.f32.gmra.mxu0 %v1292
        %v1359 = vpop.f32.mrf.mxu0
        %v1360 = vadd.f32 0.0, %v1359
        %1361 = vmatmul.f32.gmra.mxu0 %v1294
        %v1362 = vpop.f32.mrf.mxu0
        %v1363 = vadd.f32 0.0, %v1362
        %1364 = vdwg.mxu0
        %1365 = vmatpush.msra.mxu0 0.0
        %1366 = vmatpush.msra.mxu0 0.0
        %1367 = vmatpush.msra.mxu0 0.0
        %1368 = vmatpush.msra.mxu0 0.0
        %1369 = vmatpush.msra.mxu0 0.0
        %1370 = vmatpush.msra.mxu0 0.0
        %1371 = vmatpush.msra.mxu0 %v1276
        %1372 = vmatpush.msra.mxu0 %v1272
        %1373 = vmatpush.msra.mxu0 %v1268
        %1374 = vmatpush.msra.mxu0 %v1264
        %1375 = vmatpush.msra.mxu0 %v1260
        %1376 = vmatpush.msra.mxu0 %v1256
        %1377 = vmatpush.msra.mxu0 %v1252
        %1378 = vmatpush.msra.mxu0 %v1248
        %1379 = vmatpush.msra.mxu0 %v1244
        %1380 = vmatpush.msra.mxu0 %v1240
        %1381 = vmatmul.f32.gmra.mxu0 %v1292
        %v1382 = vpop.f32.mrf.mxu0
        %v1383 = vadd.f32 0.0, %v1382
        %1384 = vmatmul.f32.gmra.mxu0 %v1294
        %v1385 = vpop.f32.mrf.mxu0
        %v1386 = vadd.f32 0.0, %v1385
        %1387 = vdwg.mxu0
        %v1388 = vadd.f32 %v818, %v1314
        %v1389 = vadd.f32 %v819, %v1337
        %v1390 = vadd.f32 %v820, %v1360
        %v1391 = vadd.f32 %v821, %v1383
        %v1392 = vadd.f32 %v822, %v1317
        %v1393 = vadd.f32 %v823, %v1340
        %v1394 = vadd.f32 %v824, %v1363
        %v1395 = vadd.f32 %v825, %v1386
        %1396 = vrot.lane.b32.xlu0 %v208, 109
        %v1397 = vpop.permute.xlu0 %1396
        %1398 = vrot.lane.b32.xlu0 %v212, 109
        %v1399 = vpop.permute.xlu0 %1398
        %1400 = vrot.lane.b32.xlu0 %v209, 109
        %v1401 = vpop.permute.xlu0 %1400
        %1402 = vrot.lane.b32.xlu0 %v213, 109
        %v1403 = vpop.permute.xlu0 %1402
        %1404 = vrot.lane.b32.xlu0 %v210, 109
        %v1405 = vpop.permute.xlu0 %1404
        %1406 = vrot.lane.b32.xlu0 %v214, 109
        %v1407 = vpop.permute.xlu0 %1406
        %1408 = vrot.lane.b32.xlu0 %v211, 109
        %v1409 = vpop.permute.xlu0 %1408
        %1410 = vrot.lane.b32.xlu0 %v215, 109
        %v1411 = vpop.permute.xlu0 %1410
        %vm1412 = vcmp.lt.s32.totalorder %v257, 109
        %v1413 = vsel %vm1412, %v1405, %v1409
        %v1414 = vsel %vm1412, %v1407, %v1411
        %v1415 = vsel %vm1412, %v1401, %v1405
        %v1416 = vsel %vm1412, %v1403, %v1407
        %v1417 = vsel %vm1412, %v1397, %v1401
        %v1418 = vsel %vm1412, %v1399, %v1403
        %v1419 = vsel %vm1412, %v1409, %v1397
        %v1420 = vsel %vm1412, %v1411, %v1399
        %1421 = vst [vmem:[#allocation2 + $0x280] sm:$0xff] %v1417
        %1422 = vst [vmem:[#allocation2 + $0x288] sm:$0xff] %v1415
        %1423 = vst [vmem:[#allocation2 + $0x290] sm:$0xff] %v1413
        %1424 = vst [vmem:[#allocation2 + $0x298] sm:$0xff] %v1419
        %1425 = vst [vmem:[#allocation2 + $0x2a0] sm:$0x3] %v1418
        %1426 = vst [vmem:[#allocation2 + $0x2a8] sm:$0x3] %v1416
        %1427 = vst [vmem:[#allocation2 + $0x2b0] sm:$0x3] %v1414
        %1428 = vst [vmem:[#allocation2 + $0x2b8] sm:$0x3] %v1420
        %1429 = vrot.lane.b32.xlu0 %v208, 108
        %v1430 = vpop.permute.xlu0 %1429
        %1431 = vrot.lane.b32.xlu0 %v212, 108
        %v1432 = vpop.permute.xlu0 %1431
        %1433 = vrot.lane.b32.xlu0 %v209, 108
        %v1434 = vpop.permute.xlu0 %1433
        %1435 = vrot.lane.b32.xlu0 %v213, 108
        %v1436 = vpop.permute.xlu0 %1435
        %1437 = vrot.lane.b32.xlu0 %v210, 108
        %v1438 = vpop.permute.xlu0 %1437
        %1439 = vrot.lane.b32.xlu0 %v214, 108
        %v1440 = vpop.permute.xlu0 %1439
        %1441 = vrot.lane.b32.xlu0 %v211, 108
        %v1442 = vpop.permute.xlu0 %1441
        %1443 = vrot.lane.b32.xlu0 %v215, 108
        %v1444 = vpop.permute.xlu0 %1443
        %vm1445 = vcmp.lt.s32.totalorder %v257, 108
        %v1446 = vsel %vm1445, %v1438, %v1442
        %v1447 = vsel %vm1445, %v1440, %v1444
        %v1448 = vsel %vm1445, %v1434, %v1438
        %v1449 = vsel %vm1445, %v1436, %v1440
        %v1450 = vsel %vm1445, %v1430, %v1434
        %v1451 = vsel %vm1445, %v1432, %v1436
        %v1452 = vsel %vm1445, %v1442, %v1430
        %v1453 = vsel %vm1445, %v1444, %v1432
        %v1462 = vrot.slane %v1450, 6
        %v1463 = vrot.slane %v1448, 6
        %v1464 = vrot.slane %v1446, 6
        %v1465 = vrot.slane %v1452, 6
        %v1466 = vrot.slane %v1451, 6
        %v1467 = vsel %vm308, %v1462, %v1466
        %v1468 = vrot.slane %v1449, 6
        %v1469 = vsel %vm308, %v1463, %v1468
        %v1470 = vrot.slane %v1447, 6
        %v1471 = vsel %vm308, %v1464, %v1470
        %v1472 = vrot.slane %v1453, 6
        %v1473 = vsel %vm308, %v1465, %v1472
        %1482 = vst [vmem:[#allocation2 + $0x2a0] sm:$0xfc] %v1462
        %1483 = vst [vmem:[#allocation2 + $0x2a8] sm:$0xfc] %v1463
        %1484 = vst [vmem:[#allocation2 + $0x2b0] sm:$0xfc] %v1464
        %1485 = vst [vmem:[#allocation2 + $0x2b8] sm:$0xfc] %v1465
        %1486 = vst [vmem:[#allocation2 + $0x2c0] sm:$0xf] %v1467
        %1487 = vst [vmem:[#allocation2 + $0x2c8] sm:$0xf] %v1469
        %1488 = vst [vmem:[#allocation2 + $0x2d0] sm:$0xf] %v1471
        %1489 = vst [vmem:[#allocation2 + $0x2d8] sm:$0xf] %v1473
        %1490 = vrot.lane.b32.xlu0 %v208, 107
        %v1491 = vpop.permute.xlu0 %1490
        %1492 = vrot.lane.b32.xlu0 %v212, 107
        %v1493 = vpop.permute.xlu0 %1492
        %1494 = vrot.lane.b32.xlu0 %v209, 107
        %v1495 = vpop.permute.xlu0 %1494
        %1496 = vrot.lane.b32.xlu0 %v213, 107
        %v1497 = vpop.permute.xlu0 %1496
        %1498 = vrot.lane.b32.xlu0 %v210, 107
        %v1499 = vpop.permute.xlu0 %1498
        %1500 = vrot.lane.b32.xlu0 %v214, 107
        %v1501 = vpop.permute.xlu0 %1500
        %1502 = vrot.lane.b32.xlu0 %v211, 107
        %v1503 = vpop.permute.xlu0 %1502
        %1504 = vrot.lane.b32.xlu0 %v215, 107
        %v1505 = vpop.permute.xlu0 %1504
        %vm1506 = vcmp.lt.s32.totalorder %v257, 107
        %v1507 = vsel %vm1506, %v1499, %v1503
        %v1508 = vsel %vm1506, %v1501, %v1505
        %v1509 = vsel %vm1506, %v1495, %v1499
        %v1510 = vsel %vm1506, %v1497, %v1501
        %v1511 = vsel %vm1506, %v1491, %v1495
        %v1512 = vsel %vm1506, %v1493, %v1497
        %v1513 = vsel %vm1506, %v1503, %v1491
        %v1514 = vsel %vm1506, %v1505, %v1493
        %v1523 = vrot.slane %v1511, 4
        %v1524 = vrot.slane %v1509, 4
        %v1525 = vrot.slane %v1507, 4
        %v1526 = vrot.slane %v1513, 4
        %v1527 = vrot.slane %v1512, 4
        %v1528 = vsel %vm370, %v1523, %v1527
        %v1529 = vrot.slane %v1510, 4
        %v1530 = vsel %vm370, %v1524, %v1529
        %v1531 = vrot.slane %v1508, 4
        %v1532 = vsel %vm370, %v1525, %v1531
        %v1533 = vrot.slane %v1514, 4
        %v1534 = vsel %vm370, %v1526, %v1533
        %1543 = vst [vmem:[#allocation2 + $0x2c0] sm:$0xf0] %v1523
        %1544 = vst [vmem:[#allocation2 + $0x2c8] sm:$0xf0] %v1524
        %1545 = vst [vmem:[#allocation2 + $0x2d0] sm:$0xf0] %v1525
        %1546 = vst [vmem:[#allocation2 + $0x2d8] sm:$0xf0] %v1526
        %1547 = vst [vmem:[#allocation2 + $0x2e0] sm:$0x3f] %v1528
        %1548 = vst [vmem:[#allocation2 + $0x2e8] sm:$0x3f] %v1530
        %1549 = vst [vmem:[#allocation2 + $0x2f0] sm:$0x3f] %v1532
        %1550 = vst [vmem:[#allocation2 + $0x2f8] sm:$0x3f] %v1534
        %1551 = vrot.lane.b32.xlu0 %v208, 106
        %v1552 = vpop.permute.xlu0 %1551
        %1553 = vrot.lane.b32.xlu0 %v212, 106
        %v1554 = vpop.permute.xlu0 %1553
        %1555 = vrot.lane.b32.xlu0 %v209, 106
        %v1556 = vpop.permute.xlu0 %1555
        %1557 = vrot.lane.b32.xlu0 %v213, 106
        %v1558 = vpop.permute.xlu0 %1557
        %1559 = vrot.lane.b32.xlu0 %v210, 106
        %v1560 = vpop.permute.xlu0 %1559
        %1561 = vrot.lane.b32.xlu0 %v214, 106
        %v1562 = vpop.permute.xlu0 %1561
        %1563 = vrot.lane.b32.xlu0 %v211, 106
        %v1564 = vpop.permute.xlu0 %1563
        %1565 = vrot.lane.b32.xlu0 %v215, 106
        %v1566 = vpop.permute.xlu0 %1565
        %vm1567 = vcmp.lt.s32.totalorder %v257, 106
        %v1568 = vsel %vm1567, %v1560, %v1564
        %v1569 = vsel %vm1567, %v1562, %v1566
        %v1570 = vsel %vm1567, %v1556, %v1560
        %v1571 = vsel %vm1567, %v1558, %v1562
        %v1572 = vsel %vm1567, %v1552, %v1556
        %v1573 = vsel %vm1567, %v1554, %v1558
        %v1574 = vsel %vm1567, %v1564, %v1552
        %v1575 = vsel %vm1567, %v1566, %v1554
        %v1584 = vrot.slane %v1572, 2
        %v1585 = vrot.slane %v1570, 2
        %v1586 = vrot.slane %v1568, 2
        %v1587 = vrot.slane %v1574, 2
        %v1588 = vrot.slane %v1573, 2
        %v1589 = vsel %vm432, %v1584, %v1588
        %v1590 = vrot.slane %v1571, 2
        %v1591 = vsel %vm432, %v1585, %v1590
        %v1592 = vrot.slane %v1569, 2
        %v1593 = vsel %vm432, %v1586, %v1592
        %v1594 = vrot.slane %v1575, 2
        %v1595 = vsel %vm432, %v1587, %v1594
        %1604 = vst [vmem:[#allocation2 + $0x2e0] sm:$0xc0] %v1584
        %1605 = vst [vmem:[#allocation2 + $0x2e8] sm:$0xc0] %v1585
        %1606 = vst [vmem:[#allocation2 + $0x2f0] sm:$0xc0] %v1586
        %1607 = vst [vmem:[#allocation2 + $0x2f8] sm:$0xc0] %v1587
        %1608 = vst [vmem:[#allocation2 + $0x300] sm:$0xff] %v1589
        %1609 = vst [vmem:[#allocation2 + $0x308] sm:$0xff] %v1591
        %1610 = vst [vmem:[#allocation2 + $0x310] sm:$0xff] %v1593
        %1611 = vst [vmem:[#allocation2 + $0x318] sm:$0xff] %v1595
        %1612 = vrot.lane.b32.xlu0 %v208, 90
        %v1613 = vpop.permute.xlu0 %1612
        %1614 = vrot.lane.b32.xlu0 %v212, 90
        %v1615 = vpop.permute.xlu0 %1614
        %1616 = vrot.lane.b32.xlu0 %v209, 90
        %v1617 = vpop.permute.xlu0 %1616
        %1618 = vrot.lane.b32.xlu0 %v213, 90
        %v1619 = vpop.permute.xlu0 %1618
        %1620 = vrot.lane.b32.xlu0 %v210, 90
        %v1621 = vpop.permute.xlu0 %1620
        %1622 = vrot.lane.b32.xlu0 %v214, 90
        %v1623 = vpop.permute.xlu0 %1622
        %1624 = vrot.lane.b32.xlu0 %v211, 90
        %v1625 = vpop.permute.xlu0 %1624
        %1626 = vrot.lane.b32.xlu0 %v215, 90
        %v1627 = vpop.permute.xlu0 %1626
        %vm1628 = vcmp.lt.s32.totalorder %v257, 90
        %v1629 = vsel %vm1628, %v1621, %v1625
        %v1630 = vsel %vm1628, %v1623, %v1627
        %v1631 = vsel %vm1628, %v1617, %v1621
        %v1632 = vsel %vm1628, %v1619, %v1623
        %v1633 = vsel %vm1628, %v1613, %v1617
        %v1634 = vsel %vm1628, %v1615, %v1619
        %v1635 = vsel %vm1628, %v1625, %v1613
        %v1636 = vsel %vm1628, %v1627, %v1615
        %1637 = vst [vmem:[#allocation2 + $0x320] sm:$0xff] %v1633
        %1638 = vst [vmem:[#allocation2 + $0x328] sm:$0xff] %v1631
        %1639 = vst [vmem:[#allocation2 + $0x330] sm:$0xff] %v1629
        %1640 = vst [vmem:[#allocation2 + $0x338] sm:$0xff] %v1635
        %1641 = vst [vmem:[#allocation2 + $0x340] sm:$0x3] %v1634
        %1642 = vst [vmem:[#allocation2 + $0x348] sm:$0x3] %v1632
        %1643 = vst [vmem:[#allocation2 + $0x350] sm:$0x3] %v1630
        %1644 = vst [vmem:[#allocation2 + $0x358] sm:$0x3] %v1636
        %1645 = vrot.lane.b32.xlu0 %v208, 89
        %v1646 = vpop.permute.xlu0 %1645
        %1647 = vrot.lane.b32.xlu0 %v212, 89
        %v1648 = vpop.permute.xlu0 %1647
        %1649 = vrot.lane.b32.xlu0 %v209, 89
        %v1650 = vpop.permute.xlu0 %1649
        %1651 = vrot.lane.b32.xlu0 %v213, 89
        %v1652 = vpop.permute.xlu0 %1651
        %1653 = vrot.lane.b32.xlu0 %v210, 89
        %v1654 = vpop.permute.xlu0 %1653
        %1655 = vrot.lane.b32.xlu0 %v214, 89
        %v1656 = vpop.permute.xlu0 %1655
        %1657 = vrot.lane.b32.xlu0 %v211, 89
        %v1658 = vpop.permute.xlu0 %1657
        %1659 = vrot.lane.b32.xlu0 %v215, 89
        %v1660 = vpop.permute.xlu0 %1659
        %vm1661 = vcmp.lt.s32.totalorder %v257, 89
        %v1662 = vsel %vm1661, %v1654, %v1658
        %v1663 = vsel %vm1661, %v1656, %v1660
        %v1664 = vsel %vm1661, %v1650, %v1654
        %v1665 = vsel %vm1661, %v1652, %v1656
        %v1666 = vsel %vm1661, %v1646, %v1650
        %v1667 = vsel %vm1661, %v1648, %v1652
        %v1668 = vsel %vm1661, %v1658, %v1646
        %v1669 = vsel %vm1661, %v1660, %v1648
        %v1678 = vrot.slane %v1666, 6
        %v1679 = vrot.slane %v1664, 6
        %v1680 = vrot.slane %v1662, 6
        %v1681 = vrot.slane %v1668, 6
        %v1682 = vrot.slane %v1667, 6
        %v1683 = vsel %vm308, %v1678, %v1682
        %v1684 = vrot.slane %v1665, 6
        %v1685 = vsel %vm308, %v1679, %v1684
        %v1686 = vrot.slane %v1663, 6
        %v1687 = vsel %vm308, %v1680, %v1686
        %v1688 = vrot.slane %v1669, 6
        %v1689 = vsel %vm308, %v1681, %v1688
        %1698 = vst [vmem:[#allocation2 + $0x340] sm:$0xfc] %v1678
        %1699 = vst [vmem:[#allocation2 + $0x348] sm:$0xfc] %v1679
        %1700 = vst [vmem:[#allocation2 + $0x350] sm:$0xfc] %v1680
        %1701 = vst [vmem:[#allocation2 + $0x358] sm:$0xfc] %v1681
        %1702 = vst [vmem:[#allocation2 + $0x360] sm:$0xf] %v1683
        %1703 = vst [vmem:[#allocation2 + $0x368] sm:$0xf] %v1685
        %1704 = vst [vmem:[#allocation2 + $0x370] sm:$0xf] %v1687
        %1705 = vst [vmem:[#allocation2 + $0x378] sm:$0xf] %v1689
        %1706 = vrot.lane.b32.xlu0 %v208, 88
        %v1707 = vpop.permute.xlu0 %1706
        %1708 = vrot.lane.b32.xlu0 %v212, 88
        %v1709 = vpop.permute.xlu0 %1708
        %1710 = vrot.lane.b32.xlu0 %v209, 88
        %v1711 = vpop.permute.xlu0 %1710
        %1712 = vrot.lane.b32.xlu0 %v213, 88
        %v1713 = vpop.permute.xlu0 %1712
        %1714 = vrot.lane.b32.xlu0 %v210, 88
        %v1715 = vpop.permute.xlu0 %1714
        %1716 = vrot.lane.b32.xlu0 %v214, 88
        %v1717 = vpop.permute.xlu0 %1716
        %1718 = vrot.lane.b32.xlu0 %v211, 88
        %v1719 = vpop.permute.xlu0 %1718
        %1720 = vrot.lane.b32.xlu0 %v215, 88
        %v1721 = vpop.permute.xlu0 %1720
        %vm1722 = vcmp.lt.s32.totalorder %v257, 88
        %v1723 = vsel %vm1722, %v1715, %v1719
        %v1724 = vsel %vm1722, %v1717, %v1721
        %v1725 = vsel %vm1722, %v1711, %v1715
        %v1726 = vsel %vm1722, %v1713, %v1717
        %v1727 = vsel %vm1722, %v1707, %v1711
        %v1728 = vsel %vm1722, %v1709, %v1713
        %v1729 = vsel %vm1722, %v1719, %v1707
        %v1730 = vsel %vm1722, %v1721, %v1709
        %v1739 = vrot.slane %v1727, 4
        %v1740 = vrot.slane %v1725, 4
        %v1741 = vrot.slane %v1723, 4
        %v1742 = vrot.slane %v1729, 4
        %v1743 = vrot.slane %v1728, 4
        %v1744 = vsel %vm370, %v1739, %v1743
        %v1745 = vrot.slane %v1726, 4
        %v1746 = vsel %vm370, %v1740, %v1745
        %v1747 = vrot.slane %v1724, 4
        %v1748 = vsel %vm370, %v1741, %v1747
        %v1749 = vrot.slane %v1730, 4
        %v1750 = vsel %vm370, %v1742, %v1749
        %1759 = vst [vmem:[#allocation2 + $0x360] sm:$0xf0] %v1739
        %1760 = vst [vmem:[#allocation2 + $0x368] sm:$0xf0] %v1740
        %1761 = vst [vmem:[#allocation2 + $0x370] sm:$0xf0] %v1741
        %1762 = vst [vmem:[#allocation2 + $0x378] sm:$0xf0] %v1742
        %1763 = vst [vmem:[#allocation2 + $0x380] sm:$0x3f] %v1744
        %1764 = vst [vmem:[#allocation2 + $0x388] sm:$0x3f] %v1746
        %1765 = vst [vmem:[#allocation2 + $0x390] sm:$0x3f] %v1748
        %1766 = vst [vmem:[#allocation2 + $0x398] sm:$0x3f] %v1750
        %1767 = vrot.lane.b32.xlu0 %v208, 87
        %v1768 = vpop.permute.xlu0 %1767
        %1769 = vrot.lane.b32.xlu0 %v212, 87
        %v1770 = vpop.permute.xlu0 %1769
        %1771 = vrot.lane.b32.xlu0 %v209, 87
        %v1772 = vpop.permute.xlu0 %1771
        %1773 = vrot.lane.b32.xlu0 %v213, 87
        %v1774 = vpop.permute.xlu0 %1773
        %1775 = vrot.lane.b32.xlu0 %v210, 87
        %v1776 = vpop.permute.xlu0 %1775
        %1777 = vrot.lane.b32.xlu0 %v214, 87
        %v1778 = vpop.permute.xlu0 %1777
        %1779 = vrot.lane.b32.xlu0 %v211, 87
        %v1780 = vpop.permute.xlu0 %1779
        %1781 = vrot.lane.b32.xlu0 %v215, 87
        %v1782 = vpop.permute.xlu0 %1781
        %vm1783 = vcmp.lt.s32.totalorder %v257, 87
        %v1784 = vsel %vm1783, %v1776, %v1780
        %v1785 = vsel %vm1783, %v1778, %v1782
        %v1786 = vsel %vm1783, %v1772, %v1776
        %v1787 = vsel %vm1783, %v1774, %v1778
        %v1788 = vsel %vm1783, %v1768, %v1772
        %v1789 = vsel %vm1783, %v1770, %v1774
        %v1790 = vsel %vm1783, %v1780, %v1768
        %v1791 = vsel %vm1783, %v1782, %v1770
        %v1800 = vrot.slane %v1788, 2
        %v1801 = vrot.slane %v1786, 2
        %v1802 = vrot.slane %v1784, 2
        %v1803 = vrot.slane %v1790, 2
        %v1804 = vrot.slane %v1789, 2
        %v1805 = vsel %vm432, %v1800, %v1804
        %v1806 = vrot.slane %v1787, 2
        %v1807 = vsel %vm432, %v1801, %v1806
        %v1808 = vrot.slane %v1785, 2
        %v1809 = vsel %vm432, %v1802, %v1808
        %v1810 = vrot.slane %v1791, 2
        %v1811 = vsel %vm432, %v1803, %v1810
        %1820 = vst [vmem:[#allocation2 + $0x380] sm:$0xc0] %v1800
        %1821 = vst [vmem:[#allocation2 + $0x388] sm:$0xc0] %v1801
        %1822 = vst [vmem:[#allocation2 + $0x390] sm:$0xc0] %v1802
        %1823 = vst [vmem:[#allocation2 + $0x398] sm:$0xc0] %v1803
        %1824 = vst [vmem:[#allocation2 + $0x3a0] sm:$0xff] %v1805
        %1825 = vst [vmem:[#allocation2 + $0x3a8] sm:$0xff] %v1807
        %1826 = vst [vmem:[#allocation2 + $0x3b0] sm:$0xff] %v1809
        %1827 = vst [vmem:[#allocation2 + $0x3b8] sm:$0xff] %v1811
        %1828 = vrot.lane.b32.xlu0 %v208, 86
        %v1829 = vpop.permute.xlu0 %1828
        %1830 = vrot.lane.b32.xlu0 %v212, 86
        %v1831 = vpop.permute.xlu0 %1830
        %1832 = vrot.lane.b32.xlu0 %v209, 86
        %v1833 = vpop.permute.xlu0 %1832
        %1834 = vrot.lane.b32.xlu0 %v213, 86
        %v1835 = vpop.permute.xlu0 %1834
        %1836 = vrot.lane.b32.xlu0 %v210, 86
        %v1837 = vpop.permute.xlu0 %1836
        %1838 = vrot.lane.b32.xlu0 %v214, 86
        %v1839 = vpop.permute.xlu0 %1838
        %1840 = vrot.lane.b32.xlu0 %v211, 86
        %v1841 = vpop.permute.xlu0 %1840
        %1842 = vrot.lane.b32.xlu0 %v215, 86
        %v1843 = vpop.permute.xlu0 %1842
        %vm1844 = vcmp.lt.s32.totalorder %v257, 86
        %v1845 = vsel %vm1844, %v1837, %v1841
        %v1846 = vsel %vm1844, %v1839, %v1843
        %v1847 = vsel %vm1844, %v1833, %v1837
        %v1848 = vsel %vm1844, %v1835, %v1839
        %v1849 = vsel %vm1844, %v1829, %v1833
        %v1850 = vsel %vm1844, %v1831, %v1835
        %v1851 = vsel %vm1844, %v1841, %v1829
        %v1852 = vsel %vm1844, %v1843, %v1831
        %1853 = vst [vmem:[#allocation2 + $0x3c0] sm:$0xff] %v1849
        %1854 = vst [vmem:[#allocation2 + $0x3c8] sm:$0xff] %v1847
        %1855 = vst [vmem:[#allocation2 + $0x3d0] sm:$0xff] %v1845
        %1856 = vst [vmem:[#allocation2 + $0x3d8] sm:$0xff] %v1851
        %1857 = vst [vmem:[#allocation2 + $0x3e0] sm:$0x3] %v1850
        %1858 = vst [vmem:[#allocation2 + $0x3e8] sm:$0x3] %v1848
        %1859 = vst [vmem:[#allocation2 + $0x3f0] sm:$0x3] %v1846
        %1860 = vst [vmem:[#allocation2 + $0x3f8] sm:$0x3] %v1852
        %v1861 = vld [vmem:[#allocation6 + $0x8] sm:$0xff]
        %v1862 = vld [vmem:[#allocation6 + $0x18] sm:$0xff]
        %v1863 = vld [vmem:[#allocation2 + $0x280] sm:$0xff]
        %v1864 = vld [vmem:[#allocation2 + $0x288] sm:$0xff]
        %v1865 = vld [vmem:[#allocation2 + $0x290] sm:$0xff]
        %v1866 = vld [vmem:[#allocation2 + $0x298] sm:$0xff]
        %v1867 = vld [vmem:[#allocation2 + $0x2a0] sm:$0xff]
        %v1868 = vld [vmem:[#allocation2 + $0x2a8] sm:$0xff]
        %v1869 = vld [vmem:[#allocation2 + $0x2b0] sm:$0xff]
        %v1870 = vld [vmem:[#allocation2 + $0x2b8] sm:$0xff]
        %v1871 = vld [vmem:[#allocation2 + $0x2c0] sm:$0xff]
        %v1872 = vld [vmem:[#allocation2 + $0x2c8] sm:$0xff]
        %v1873 = vld [vmem:[#allocation2 + $0x2d0] sm:$0xff]
        %v1874 = vld [vmem:[#allocation2 + $0x2d8] sm:$0xff]
        %v1875 = vld [vmem:[#allocation2 + $0x2e0] sm:$0xff]
        %v1876 = vld [vmem:[#allocation2 + $0x2e8] sm:$0xff]
        %v1877 = vld [vmem:[#allocation2 + $0x2f0] sm:$0xff]
        %v1878 = vld [vmem:[#allocation2 + $0x2f8] sm:$0xff]
        %v1879 = vld [vmem:[#allocation2 + $0x300] sm:$0xff]
        %v1880 = vld [vmem:[#allocation2 + $0x308] sm:$0xff]
        %v1881 = vld [vmem:[#allocation2 + $0x310] sm:$0xff]
        %v1882 = vld [vmem:[#allocation2 + $0x318] sm:$0xff]
        %v1883 = vld [vmem:[#allocation2 + $0x320] sm:$0xff]
        %v1884 = vld [vmem:[#allocation2 + $0x328] sm:$0xff]
        %v1885 = vld [vmem:[#allocation2 + $0x330] sm:$0xff]
        %v1886 = vld [vmem:[#allocation2 + $0x338] sm:$0xff]
        %v1887 = vld [vmem:[#allocation2 + $0x340] sm:$0xff]
        %v1888 = vld [vmem:[#allocation2 + $0x348] sm:$0xff]
        %v1889 = vld [vmem:[#allocation2 + $0x350] sm:$0xff]
        %v1890 = vld [vmem:[#allocation2 + $0x358] sm:$0xff]
        %v1891 = vld [vmem:[#allocation2 + $0x360] sm:$0xff]
        %v1892 = vld [vmem:[#allocation2 + $0x368] sm:$0xff]
        %v1893 = vld [vmem:[#allocation2 + $0x370] sm:$0xff]
        %v1894 = vld [vmem:[#allocation2 + $0x378] sm:$0xff]
        %v1895 = vld [vmem:[#allocation2 + $0x380] sm:$0xff]
        %v1896 = vld [vmem:[#allocation2 + $0x388] sm:$0xff]
        %v1897 = vld [vmem:[#allocation2 + $0x390] sm:$0xff]
        %v1898 = vld [vmem:[#allocation2 + $0x398] sm:$0xff]
        %v1899 = vld [vmem:[#allocation2 + $0x3a0] sm:$0xff]
        %v1900 = vld [vmem:[#allocation2 + $0x3a8] sm:$0xff]
        %v1901 = vld [vmem:[#allocation2 + $0x3b0] sm:$0xff]
        %v1902 = vld [vmem:[#allocation2 + $0x3b8] sm:$0xff]
        %v1903 = vld [vmem:[#allocation2 + $0x3c0] sm:$0xff]
        %v1904 = vld [vmem:[#allocation2 + $0x3c8] sm:$0xff]
        %v1905 = vld [vmem:[#allocation2 + $0x3d0] sm:$0xff]
        %v1906 = vld [vmem:[#allocation2 + $0x3d8] sm:$0xff]
        %v1907 = vld [vmem:[#allocation2 + $0x3e0] sm:$0xff]
        %v1908 = vld [vmem:[#allocation2 + $0x3e8] sm:$0xff]
        %v1909 = vld [vmem:[#allocation2 + $0x3f0] sm:$0xff]
        %v1910 = vld [vmem:[#allocation2 + $0x3f8] sm:$0xff]
        %1913 = vrot.lane.b32.xlu0 %v1861, 96
        %v1914 = vpop.permute.xlu0 %1913
        %1915 = vrot.lane.b32.xlu0 %v1862, 96
        %v1916 = vpop.permute.xlu0 %1915
        %vm1917 = vcmask 785408
        %v1918 = vsel %vm1917, %v1914, 0
        %v1920 = vsel %vm1917, %v1916, 0
        %1922 = vmatpush.msra.mxu0 0.0
        %1923 = vmatpush.msra.mxu0 0.0
        %1924 = vmatpush.msra.mxu0 0.0
        %1925 = vmatpush.msra.mxu0 0.0
        %1926 = vmatpush.msra.mxu0 %v1907
        %1927 = vmatpush.msra.mxu0 %v1903
        %1928 = vmatpush.msra.mxu0 %v1899
        %1929 = vmatpush.msra.mxu0 %v1895
        %1930 = vmatpush.msra.mxu0 %v1891
        %1931 = vmatpush.msra.mxu0 %v1887
        %1932 = vmatpush.msra.mxu0 %v1883
        %1933 = vmatpush.msra.mxu0 %v1879
        %1934 = vmatpush.msra.mxu0 %v1875
        %1935 = vmatpush.msra.mxu0 %v1871
        %1936 = vmatpush.msra.mxu0 %v1867
        %1937 = vmatpush.msra.mxu0 %v1863
        %1938 = vmatmul.f32.gmra.mxu0 %v1918
        %v1939 = vpop.f32.mrf.mxu0
        %v1940 = vadd.f32 0.0, %v1939
        %1941 = vmatmul.f32.gmra.mxu0 %v1920
        %v1942 = vpop.f32.mrf.mxu0
        %v1943 = vadd.f32 0.0, %v1942
        %1944 = vdwg.mxu0
        %1945 = vmatpush.msra.mxu0 0.0
        %1946 = vmatpush.msra.mxu0 0.0
        %1947 = vmatpush.msra.mxu0 0.0
        %1948 = vmatpush.msra.mxu0 0.0
        %1949 = vmatpush.msra.mxu0 %v1908
        %1950 = vmatpush.msra.mxu0 %v1904
        %1951 = vmatpush.msra.mxu0 %v1900
        %1952 = vmatpush.msra.mxu0 %v1896
        %1953 = vmatpush.msra.mxu0 %v1892
        %1954 = vmatpush.msra.mxu0 %v1888
        %1955 = vmatpush.msra.mxu0 %v1884
        %1956 = vmatpush.msra.mxu0 %v1880
        %1957 = vmatpush.msra.mxu0 %v1876
        %1958 = vmatpush.msra.mxu0 %v1872
        %1959 = vmatpush.msra.mxu0 %v1868
        %1960 = vmatpush.msra.mxu0 %v1864
        %1961 = vmatmul.f32.gmra.mxu0 %v1918
        %v1962 = vpop.f32.mrf.mxu0
        %v1963 = vadd.f32 0.0, %v1962
        %1964 = vmatmul.f32.gmra.mxu0 %v1920
        %v1965 = vpop.f32.mrf.mxu0
        %v1966 = vadd.f32 0.0, %v1965
        %1967 = vdwg.mxu0
        %1968 = vmatpush.msra.mxu0 0.0
        %1969 = vmatpush.msra.mxu0 0.0
        %1970 = vmatpush.msra.mxu0 0.0
        %1971 = vmatpush.msra.mxu0 0.0
        %1972 = vmatpush.msra.mxu0 %v1909
        %1973 = vmatpush.msra.mxu0 %v1905
        %1974 = vmatpush.msra.mxu0 %v1901
        %1975 = vmatpush.msra.mxu0 %v1897
        %1976 = vmatpush.msra.mxu0 %v1893
        %1977 = vmatpush.msra.mxu0 %v1889
        %1978 = vmatpush.msra.mxu0 %v1885
        %1979 = vmatpush.msra.mxu0 %v1881
        %1980 = vmatpush.msra.mxu0 %v1877
        %1981 = vmatpush.msra.mxu0 %v1873
        %1982 = vmatpush.msra.mxu0 %v1869
        %1983 = vmatpush.msra.mxu0 %v1865
        %1984 = vmatmul.f32.gmra.mxu0 %v1918
        %v1985 = vpop.f32.mrf.mxu0
        %v1986 = vadd.f32 0.0, %v1985
        %1987 = vmatmul.f32.gmra.mxu0 %v1920
        %v1988 = vpop.f32.mrf.mxu0
        %v1989 = vadd.f32 0.0, %v1988
        %1990 = vdwg.mxu0
        %1991 = vmatpush.msra.mxu0 0.0
        %1992 = vmatpush.msra.mxu0 0.0
        %1993 = vmatpush.msra.mxu0 0.0
        %1994 = vmatpush.msra.mxu0 0.0
        %1995 = vmatpush.msra.mxu0 %v1910
        %1996 = vmatpush.msra.mxu0 %v1906
        %1997 = vmatpush.msra.mxu0 %v1902
        %1998 = vmatpush.msra.mxu0 %v1898
        %1999 = vmatpush.msra.mxu0 %v1894
        %2000 = vmatpush.msra.mxu0 %v1890
        %2001 = vmatpush.msra.mxu0 %v1886
        %2002 = vmatpush.msra.mxu0 %v1882
        %2003 = vmatpush.msra.mxu0 %v1878
        %2004 = vmatpush.msra.mxu0 %v1874
        %2005 = vmatpush.msra.mxu0 %v1870
        %2006 = vmatpush.msra.mxu0 %v1866
        %2007 = vmatmul.f32.gmra.mxu0 %v1918
        %v2008 = vpop.f32.mrf.mxu0
        %v2009 = vadd.f32 0.0, %v2008
        %2010 = vmatmul.f32.gmra.mxu0 %v1920
        %v2011 = vpop.f32.mrf.mxu0
        %v2012 = vadd.f32 0.0, %v2011
        %2013 = vdwg.mxu0
        %v2014 = vadd.f32 %v1388, %v1940
        %v2015 = vadd.f32 %v1389, %v1963
        %v2016 = vadd.f32 %v1390, %v1986
        %v2017 = vadd.f32 %v1391, %v2009
        %v2018 = vadd.f32 %v1392, %v1943
        %v2019 = vadd.f32 %v1393, %v1966
        %v2020 = vadd.f32 %v1394, %v1989
        %v2021 = vadd.f32 %v1395, %v2012
        %2022 = vst [vmem:[%s207] sm:$0xff] %v2014
        %2023 = vst [vmem:[%s207 + $0x8] sm:$0xff] %v2015
        %2024 = vst [vmem:[%s207 + $0x10] sm:$0xff] %v2016
        %2025 = vst [vmem:[%s207 + $0x18] sm:$0xff] %v2017
        %2026 = vst [vmem:[%s207 + $0x20] sm:$0xff] %v2018
        %2027 = vst [vmem:[%s207 + $0x28] sm:$0xff] %v2019
        %2028 = vst [vmem:[%s207 + $0x30] sm:$0xff] %v2020
        %2029 = vst [vmem:[%s207 + $0x38] sm:$0xff] %v2021
        %s2030 = sand.u32 %s97, 1
        %s2031 = scalar_lea.sflag [#allocation5], %s2030
        %s2032 = sand.u32 %s97, 1
        %s2033 = smul.addr %s2032, 64
        %s2034 = scalar_lea.vmem [#allocation8], %s2033
        // Predicated region
        $region41: #{tpu_custom_call.1} parent=31 // pred_check
          %p2035 = pneg %p107
        $region42: #{tpu_custom_call.1} parent=31 // pred_check_branch
          %2037 = sbr.rel (%p2035) target = $region44
        $region43: #{tpu_custom_call.1} parent=31 // pred_region
          %2039 = vsyncadd %s2031, 0
          %s2040 = smul.addr %s21, 8
          %s2041 = smul.addr %s2040, 8
          %s2042 = scalar_lea.hbm %s3, %s2041
          %s2043 = sshll.u32 %s2034, 4
          %s2044 = int_to_ptr.vmem [resolvable:$true] %s2043
          %s2045 = sshll.u32 %s2042, 4
          %s2046 = int_to_ptr.hbm [resolvable:$true] %s2045
          %2051 = dma.vmem_to_hbm [thread:$0]  %s2044, 1024, %s2046, %s2031, 512, 512, 32
        $region44: #{tpu_custom_call.1} parent=31 // pred_fallthru
          _
      $region32: #{tpu_custom_call.1} parent=5 // pred_fallthru
        _
      %p2052 = scmp.le.s32.totalorder 2, %s16
      // Predicated region
      $region45: #{tpu_custom_call.1} parent=5 // pred_check
        %p2053 = pneg %p2052
      $region46: #{tpu_custom_call.1} parent=5 // pred_check_branch
        %2055 = sbr.rel (%p2053) target = $region48
      $region47: #{tpu_custom_call.1} parent=5 // pred_region
        %s2056 = ssub.s32 %s16, 2
        // Predicated region
        $region49: #{tpu_custom_call.1} parent=47 // pred_check
          %p2057 = pneg %p113
        $region50: #{tpu_custom_call.1} parent=47 // pred_check_branch
          %2059 = sbr.rel (%p2057) target = $region52
        $region51: #{tpu_custom_call.1} parent=47 // pred_region
          %s2060 = sand.u32 %s98, 1
          %s2061 = scalar_lea.sflag [#allocation5], %s2060
          %s2062 = sand.u32 %s98, 1
          %s2063 = smul.addr %s2062, 64
          %s2064 = scalar_lea.vmem [#allocation8], %s2063
          %2066 = dma.done %s2061, 1024
        $region52: #{tpu_custom_call.1} parent=47 // pred_fallthru
          _
      $region48: #{tpu_custom_call.1} parent=5 // pred_fallthru
        _
    $region6: #{tpu_custom_call.1} parent=1 // loop_footer
      %s20 = sadd.s32 1, %s16
    $region7: #{tpu_custom_call.1} parent=1 // loop_footer_branch
      %15 = sbr.rel target = $region3
    $region8: #{tpu_custom_call.1} parent=1 // loop_exit
      _
    %2067 = vsyncpa [#allocation4], 1
    %s2068 = scalar_lea.sflag [#allocation4], 1
    %2069 = vsyncpa %s2068, 1
    %2070 = vsyncpa [#allocation7], 1
    %2071 = vsyncpa [#allocation5], 1
    %s2072 = scalar_lea.sflag [#allocation5], 1
    %2073 = vsyncpa %s2072, 1

</llo_original>
